<compile_context>
chip_gen: v7x
topology: tpu7x:2x2x1
jax: 0.10.0
libtpu: 0.0.40
codegen_flags: <defaults>
</compile_context>

<pallas_src>
import functools

import numpy as np
import jax
import jax.numpy as jnp
from jax import lax
from jax.experimental import pallas as pl
from jax.experimental.pallas import tpu as pltpu


def precompute_block_table(adj_np, tm, tk):
    """Host-side, graph-static: flattened list of nonzero (row-tile, col-tile) blocks.

    Returns (rows, cols) int32 device arrays of length n_steps, grouped by row
    tile (all blocks of a row tile are consecutive).  Row tiles with no nonzero
    block get one dummy (r, 0) entry so their epilogue still runs (that block is
    all zeros, so it contributes nothing).
    """
    N = adj_np.shape[0]
    assert N % tm == 0 and N % tk == 0, "N must be divisible by tm and tk"
    n_i, n_k = N // tm, N // tk
    blk_nz = adj_np.reshape(n_i, tm, n_k, tk).any(axis=(1, 3))   # (n_i, n_k) bool
    rows, cols = [], []
    for r in range(n_i):
        nz = np.nonzero(blk_nz[r])[0]
        if nz.size == 0:
            nz = np.zeros((1,), np.int64)
        rows.extend([r] * int(nz.size))
        cols.extend(int(c) for c in nz)
    return (jnp.asarray(np.asarray(rows, np.int32)),
            jnp.asarray(np.asarray(cols, np.int32)))


def ngcf_layer(adj_i8, rows, cols, norm, user_emb, item_emb, w1, w2, *,
               tm=512, tk=2048):
    """NGCF layer forward (jit-compatible; graph-static tables passed in).

    adj_i8 : (N, N) int8 0/1 adjacency (row = dst, col = src)
    rows   : (n_steps,) int32 row-tile id per nonzero block (non-decreasing)
    cols   : (n_steps,) int32 col-tile id per nonzero block
    norm   : (N,) f32 symmetric normalization (1/sqrt(deg))
    user_emb, item_emb : node embeddings, concat -> H (N, Din)
    w1, w2 : (Dout, Din) projection weights (no bias)
    returns (N, Dout) in the embedding dtype.
    """
    h = jnp.concatenate([user_emb, item_emb], axis=0)
    N, Din = h.shape
    Dout = w1.shape[0]
    out_dtype = h.dtype

    tm = min(tm, N)
    tk = min(tk, N)
    assert N % tm == 0 and N % tk == 0, "N must be divisible by tm and tk"
    n_steps = rows.shape[0]

    h32 = h.astype(jnp.float32)                               # row features (epilogue)
    h_src = (norm[:, None] * h32).astype(jnp.bfloat16)        # H' = diag(norm) @ H
    norm_col = norm[:, None].astype(jnp.float32)              # (N, 1) dst scale
    w_cat = jnp.concatenate([w1.T, w2.T], axis=0).astype(jnp.bfloat16)  # (2*Din, Dout)

    def kernel(rows_ref, cols_ref, a_ref, hsrc_ref, hrow_ref, nrm_ref, w_ref,
               o_ref, acc_ref):
        t = pl.program_id(0)
        row = rows_ref[t]
        prev_row = rows_ref[jnp.maximum(t - 1, 0)]
        next_row = rows_ref[jnp.minimum(t + 1, n_steps - 1)]

        # New row group -> reset the S accumulator.
        @pl.when(jnp.logical_or(t == 0, row != prev_row))
        def _():
            acc_ref[...] = jnp.zeros_like(acc_ref)

        # adj is 0/1 so the i8 -> f32 -> bf16 cast is exact (sitofp path kept for
        # robust lowering).  Accumulate T = adj_tile @ (diag(norm) H)[col_tile].
        a_bf = a_ref[...].astype(jnp.float32).astype(jnp.bfloat16)
        acc_ref[...] += jnp.dot(a_bf, hsrc_ref[...],
                                preferred_element_type=jnp.float32)

        # Last block of this row group -> projection + activation + normalize.
        @pl.when(jnp.logical_or(t == n_steps - 1, next_row != row))
        def _():
            s = acc_ref[...] * nrm_ref[...]        # apply dst norm_i  -> S row block
            hi = hrow_ref[...]                     # unscaled H row block (f32)
            # Stacked weights: sublane-aligned static views of one resident input.
            w1t = w_ref[0:Din, :]                  # (Din, Dout) bf16
            w2t = w_ref[Din:2 * Din, :]
            m = jnp.dot((s + hi).astype(jnp.bfloat16), w1t,
                        preferred_element_type=jnp.float32)
            m = m + jnp.dot((hi * s).astype(jnp.bfloat16), w2t,
                            preferred_element_type=jnp.float32)
            # LeakyReLU(0.2); dropout p=0 -> identity.
            act = jnp.where(m >= 0, m, 0.2 * m)
            # F.normalize(p=2, dim=1): x / max(||x||, 1e-12) via EUP rsqrt.
            sumsq = jnp.sum(act * act, axis=1, keepdims=True)
            inv = lax.rsqrt(jnp.maximum(sumsq, 1e-24))
            o_ref[...] = (act * inv).astype(o_ref.dtype)

    return pl.pallas_call(
        kernel,
        out_shape=jax.ShapeDtypeStruct((N, Dout), out_dtype),
        grid_spec=pltpu.PrefetchScalarGridSpec(
            num_scalar_prefetch=2,
            grid=(n_steps,),
            in_specs=[
                # int8 adjacency tile of the t-th nonzero block.
                pl.BlockSpec((tm, tk), lambda t, r, c: (r[t], c[t])),
                # pre-scaled source features for that column tile.
                pl.BlockSpec((tk, Din), lambda t, r, c: (c[t], 0)),
                # epilogue row inputs (DMA dedup'd across a row group).
                pl.BlockSpec((tm, Din), lambda t, r, c: (r[t], 0)),
                pl.BlockSpec((tm, 1), lambda t, r, c: (r[t], 0)),
                # stacked projection weights, resident (constant index map).
                pl.BlockSpec((2 * Din, Dout), lambda t, r, c: (0, 0)),
            ],
            out_specs=pl.BlockSpec((tm, Dout), lambda t, r, c: (r[t], 0)),
            scratch_shapes=[pltpu.VMEM((tm, Din), jnp.float32)],   # S accumulator
        ),
        compiler_params=pltpu.CompilerParams(
            dimension_semantics=("arbitrary",),
            vmem_limit_bytes=48 * 1024 * 1024,   # fits v7x's 64 MiB physical VMEM
        ),
    )(rows, cols, adj_i8, h_src, h32, norm_col, w_cat)


def xavier_uniform(key, out_dim, in_dim):
    bound = float(np.sqrt(6.0 / (in_dim + out_dim)))
    return jax.random.uniform(key, (out_dim, in_dim), jnp.float32, -bound, bound)


def reference(adj, norm, user_emb, item_emb, w1, w2):
    """Pure-JAX reference mirroring the kernel's intentional bf16 rounding."""
    h = jnp.concatenate([user_emb, item_emb], axis=0).astype(jnp.float32)
    hp = (norm[:, None] * h).astype(jnp.bfloat16)
    t = jnp.dot(adj.astype(jnp.bfloat16), hp, preferred_element_type=jnp.float32)
    s = norm[:, None] * t
    m = jnp.dot((s + h).astype(jnp.bfloat16), w1.T.astype(jnp.bfloat16),
                preferred_element_type=jnp.float32)
    m = m + jnp.dot((h * s).astype(jnp.bfloat16), w2.T.astype(jnp.bfloat16),
                    preferred_element_type=jnp.float32)
    act = jnp.where(m >= 0, m, 0.2 * m)
    nrm = jnp.maximum(jnp.sqrt(jnp.sum(act * act, axis=1, keepdims=True)), 1e-12)
    return act / nrm


if __name__ == "__main__":
    key = jax.random.PRNGKey(0)
    k_u, k_i, k_adj, k_w1, k_w2 = jax.random.split(key, 5)

    num_users, num_items = 384, 128
    in_dim, out_dim = 32, 32
    N = num_users + num_items

    user_emb = jax.random.normal(k_u, (num_users, in_dim), jnp.float32) * 0.1
    item_emb = jax.random.normal(k_i, (num_items, in_dim), jnp.float32) * 0.1

    # Deterministic bipartite user-item graph (undirected => symmetric adjacency).
    ui = (jax.random.uniform(k_adj, (num_users, num_items)) < 0.05).astype(jnp.float32)
    adj = jnp.zeros((N, N), jnp.float32)
    adj = adj.at[:num_users, num_users:].set(ui)
    adj = adj.at[num_users:, :num_users].set(ui.T)
    deg = jnp.maximum(adj.sum(axis=1), 1.0)
    norm = 1.0 / jnp.sqrt(deg)                                   # (N,) symmetric norm

    # Xavier-uniform weights, as in init_weights (no bias).
    w1 = xavier_uniform(k_w1, out_dim, in_dim)
    w2 = xavier_uniform(k_w2, out_dim, in_dim)

    # ---- graph-static precompute (once per graph, NOT per layer call) ----------
    adj_np = np.asarray(adj)
    adj_i8 = jnp.asarray(adj_np.astype(np.int8))     # 0/1 adjacency, exact in int8
    # tk=128 divides both num_users and num_items -> the structurally-zero
    # user-user / item-item quadrants stay block-aligned and are fully skipped.
    rows_s, cols_s = precompute_block_table(adj_np, tm=128, tk=128)
    rows_b, cols_b = precompute_block_table(adj_np, tm=256, tk=512)

    ref = reference(adj, norm, user_emb, item_emb, w1, w2)

    # Boundary-aligned small tiles: exercises block skipping + flattened grid
    # (6 grid steps instead of 16 dense / 12 padded).
    run_small = jax.jit(functools.partial(ngcf_layer, tm=128, tk=128))
    out_small = jax.block_until_ready(
        run_small(adj_i8, rows_s, cols_s, norm, user_emb, item_emb, w1, w2))

    # Larger tiles (capped to N): exercises the big-tile path.
    run_big = jax.jit(functools.partial(ngcf_layer, tm=256, tk=512))
    out_big = jax.block_until_ready(
        run_big(adj_i8, rows_b, cols_b, norm, user_emb, item_emb, w1, w2))

    np.testing.assert_allclose(np.asarray(out_small), np.asarray(ref),
                               rtol=1e-2, atol=2e-3)
    np.testing.assert_allclose(np.asarray(out_big), np.asarray(ref),
                               rtol=1e-2, atol=2e-3)

    print("KERNEL_OK")
</pallas_src>

<mosaic_0001>
module attributes {stable_mosaic.version = 11 : i64} {
  func.func @kernel(%arg0: i32, %arg1: memref<6xi32, #tpu.memory_space<smem>>, %arg2: memref<6xi32, #tpu.memory_space<smem>>, %arg3: memref<128x128xi8, #tpu.memory_space<vmem>>, %arg4: memref<128x32xbf16, #tpu.memory_space<vmem>>, %arg5: memref<128x32xf32, #tpu.memory_space<vmem>>, %arg6: memref<128x1xf32, #tpu.memory_space<vmem>>, %arg7: memref<64x32xbf16, #tpu.memory_space<vmem>>, %arg8: memref<128x32xf32, #tpu.memory_space<vmem>>, %arg9: memref<128x32xf32, #tpu.memory_space<vmem>>) attributes {dimension_semantics = [#tpu.dimension_semantics<arbitrary>], iteration_bounds = array<i64: 6>, scalar_prefetch = 2 : i64, scratch_operands = 1 : i64, tpu.core_type = #tpu.core_type<tc>, window_params = [{transform_indices = @transform_0, window_bounds = array<i64: 128, 128>}, {transform_indices = @transform_1, window_bounds = array<i64: 128, 32>}, {transform_indices = @transform_2, window_bounds = array<i64: 128, 32>}, {transform_indices = @transform_3, window_bounds = array<i64: 128, 1>}, {pipeline_mode = #tpu.pipeline_mode<synchronous>, transform_indices = @transform_4, window_bounds = array<i64: 64, 32>}, {transform_indices = @transform_5, window_bounds = array<i64: 128, 32>}]} {
    %0 = arith.index_cast %arg0 : i32 to index
    %1 = memref.load %arg1[%0] : memref<6xi32, #tpu.memory_space<smem>>
    %c1_i32 = arith.constant 1 : i32
    %2 = arith.subi %arg0, %c1_i32 : i32
    %c0_i32 = arith.constant 0 : i32
    %3 = arith.maxsi %2, %c0_i32 : i32
    %4 = arith.index_cast %3 : i32 to index
    %5 = memref.load %arg1[%4] : memref<6xi32, #tpu.memory_space<smem>>
    %c1_i32_0 = arith.constant 1 : i32
    %6 = arith.addi %arg0, %c1_i32_0 : i32
    %c5_i32 = arith.constant 5 : i32
    %7 = arith.minsi %6, %c5_i32 : i32
    %8 = arith.index_cast %7 : i32 to index
    %9 = memref.load %arg1[%8] : memref<6xi32, #tpu.memory_space<smem>>
    %c0_i32_1 = arith.constant 0 : i32
    %10 = arith.cmpi eq, %arg0, %c0_i32_1 : i32
    %11 = arith.cmpi ne, %1, %5 : i32
    %12 = arith.ori %10, %11 : i1
    %13 = arith.extui %12 : i1 to i32
    %c0_i32_2 = arith.constant 0 : i32
    %14 = arith.cmpi ne, %13, %c0_i32_2 : i32
    scf.if %14 {
      %cst_12 = arith.constant 0.000000e+00 : f32
      %28 = vector.broadcast %cst_12 : f32 to vector<128x32xf32>
      %c0_13 = arith.constant 0 : index
      %c0_14 = arith.constant 0 : index
      %29 = vector.load %arg9[%c0_13, %c0_14] : memref<128x32xf32, #tpu.memory_space<vmem>>, vector<128x32xf32>
      tpu.vector_store %arg9[%c0_13, %c0_14], %28 {strides = array<i32>} : memref<128x32xf32, #tpu.memory_space<vmem>>, vector<128x32xf32>,
    } else {
    }
    %c0 = arith.constant 0 : index
    %c0_3 = arith.constant 0 : index
    %15 = vector.load %arg3[%c0, %c0_3] : memref<128x128xi8, #tpu.memory_space<vmem>>, vector<128x128xi8>
    %16 = arith.sitofp %15 : vector<128x128xi8> to vector<128x128xf32>
    %17 = arith.truncf %16 : vector<128x128xf32> to vector<128x128xbf16>
    %c0_4 = arith.constant 0 : index
    %c0_5 = arith.constant 0 : index
    %18 = vector.load %arg9[%c0_4, %c0_5] : memref<128x32xf32, #tpu.memory_space<vmem>>, vector<128x32xf32>
    %c0_6 = arith.constant 0 : index
    %c0_7 = arith.constant 0 : index
    %19 = vector.load %arg4[%c0_6, %c0_7] : memref<128x32xbf16, #tpu.memory_space<vmem>>, vector<128x32xbf16>
    %cst = arith.constant dense<0.000000e+00> : vector<128x32xf32>
    %20 = tpu.matmul %17, %19, %cst {dimension_numbers = #tpu.dot_dimension_numbers<[1], [0], [0], [1], [0, 0, 1, 1], [], []>} : vector<128x128xbf16>, vector<128x32xbf16>, vector<128x32xf32> -> vector<128x32xf32>
    %21 = arith.addf %18, %20 : vector<128x32xf32>
    %c0_8 = arith.constant 0 : index
    %c0_9 = arith.constant 0 : index
    %22 = vector.load %arg9[%c0_8, %c0_9] : memref<128x32xf32, #tpu.memory_space<vmem>>, vector<128x32xf32>
    tpu.vector_store %arg9[%c0_8, %c0_9], %21 {strides = array<i32>} : memref<128x32xf32, #tpu.memory_space<vmem>>, vector<128x32xf32>,
    %c5_i32_10 = arith.constant 5 : i32
    %23 = arith.cmpi eq, %arg0, %c5_i32_10 : i32
    %24 = arith.cmpi ne, %9, %1 : i32
    %25 = arith.ori %23, %24 : i1
    %26 = arith.extui %25 : i1 to i32
    %c0_i32_11 = arith.constant 0 : i32
    %27 = arith.cmpi ne, %26, %c0_i32_11 : i32
    scf.if %27 {
      %c0_12 = arith.constant 0 : index
      %c0_13 = arith.constant 0 : index
      %28 = vector.load %arg9[%c0_12, %c0_13] : memref<128x32xf32, #tpu.memory_space<vmem>>, vector<128x32xf32>
      %c0_14 = arith.constant 0 : index
      %c0_15 = arith.constant 0 : index
      %29 = vector.load %arg6[%c0_14, %c0_15] : memref<128x1xf32, #tpu.memory_space<vmem>>, vector<128x1xf32>
      %30 = vector.broadcast %29 : vector<128x1xf32> to vector<128x32xf32>
      %31 = arith.mulf %28, %30 : vector<128x32xf32>
      %c0_16 = arith.constant 0 : index
      %c0_17 = arith.constant 0 : index
      %32 = vector.load %arg5[%c0_16, %c0_17] : memref<128x32xf32, #tpu.memory_space<vmem>>, vector<128x32xf32>
      %c0_18 = arith.constant 0 : index
      %c0_19 = arith.constant 0 : index
      %33 = vector.load %arg7[%c0_18, %c0_19] : memref<64x32xbf16, #tpu.memory_space<vmem>>, vector<32x32xbf16>
      %c32 = arith.constant 32 : index
      %c0_20 = arith.constant 0 : index
      %34 = vector.load %arg7[%c32, %c0_20] : memref<64x32xbf16, #tpu.memory_space<vmem>>, vector<32x32xbf16>
      %35 = arith.addf %31, %32 : vector<128x32xf32>
      %36 = arith.truncf %35 : vector<128x32xf32> to vector<128x32xbf16>
      %cst_21 = arith.constant dense<0.000000e+00> : vector<128x32xf32>
      %37 = tpu.matmul %36, %33, %cst_21 {dimension_numbers = #tpu.dot_dimension_numbers<[1], [0], [0], [1], [0, 0, 1, 1], [], []>} : vector<128x32xbf16>, vector<32x32xbf16>, vector<128x32xf32> -> vector<128x32xf32>
      %38 = arith.mulf %32, %31 : vector<128x32xf32>
      %39 = arith.truncf %38 : vector<128x32xf32> to vector<128x32xbf16>
      %cst_22 = arith.constant dense<0.000000e+00> : vector<128x32xf32>
      %40 = tpu.matmul %39, %34, %cst_22 {dimension_numbers = #tpu.dot_dimension_numbers<[1], [0], [0], [1], [0, 0, 1, 1], [], []>} : vector<128x32xbf16>, vector<32x32xbf16>, vector<128x32xf32> -> vector<128x32xf32>
      %41 = arith.addf %37, %40 : vector<128x32xf32>
      %cst_23 = arith.constant 0.000000e+00 : f32
      %42 = vector.broadcast %cst_23 : f32 to vector<128x32xf32>
      %43 = arith.cmpf oge, %41, %42 : vector<128x32xf32>
      %cst_24 = arith.constant 2.000000e-01 : f32
      %44 = vector.broadcast %cst_24 : f32 to vector<128x32xf32>
      %45 = arith.mulf %44, %41 : vector<128x32xf32>
      %46 = arith.select %43, %41, %45 : vector<128x32xi1>, vector<128x32xf32>
      %47 = arith.mulf %46, %46 : vector<128x32xf32>
      %cst_25 = arith.constant dense<0.000000e+00> : vector<128xf32>
      %48 = vector.multi_reduction <add>, %47, %cst_25 [1] : vector<128x32xf32> to vector<128xf32>
      %49 = vector.shape_cast %48 : vector<128xf32> to vector<128x1xf32>
      %cst_26 = arith.constant 1.000000e-24 : f32
      %50 = vector.broadcast %cst_26 : f32 to vector<128x1xf32>
      %51 = arith.maximumf %49, %50 : vector<128x1xf32>
      %52 = math.rsqrt %51 : vector<128x1xf32>
      %53 = vector.broadcast %52 : vector<128x1xf32> to vector<128x32xf32>
      %54 = arith.mulf %46, %53 : vector<128x32xf32>
      %c0_27 = arith.constant 0 : index
      %c0_28 = arith.constant 0 : index
      %55 = vector.load %arg8[%c0_27, %c0_28] : memref<128x32xf32, #tpu.memory_space<vmem>>, vector<128x32xf32>
      tpu.vector_store %arg8[%c0_27, %c0_28], %54 {strides = array<i32>} : memref<128x32xf32, #tpu.memory_space<vmem>>, vector<128x32xf32>,
    } else {
    }
    return
  }
  func.func @transform_0(%arg0: i32, %arg1: memref<6xi32, #tpu.memory_space<smem>>, %arg2: memref<6xi32, #tpu.memory_space<smem>>) -> (i32, i32) {
    %0 = arith.index_cast %arg0 : i32 to index
    %1 = memref.load %arg1[%0] : memref<6xi32, #tpu.memory_space<smem>>
    %2 = arith.index_cast %arg0 : i32 to index
    %3 = memref.load %arg2[%2] : memref<6xi32, #tpu.memory_space<smem>>
    %c0_i32 = arith.constant 0 : i32
    return %1, %3 : i32, i32
  }
  func.func @transform_1(%arg0: i32, %arg1: memref<6xi32, #tpu.memory_space<smem>>, %arg2: memref<6xi32, #tpu.memory_space<smem>>) -> (i32, i32) {
    %0 = arith.index_cast %arg0 : i32 to index
    %1 = memref.load %arg2[%0] : memref<6xi32, #tpu.memory_space<smem>>
    %c0_i32 = arith.constant 0 : i32
    %c0_i32_0 = arith.constant 0 : i32
    return %1, %c0_i32 : i32, i32
  }
  func.func @transform_2(%arg0: i32, %arg1: memref<6xi32, #tpu.memory_space<smem>>, %arg2: memref<6xi32, #tpu.memory_space<smem>>) -> (i32, i32) {
    %0 = arith.index_cast %arg0 : i32 to index
    %1 = memref.load %arg1[%0] : memref<6xi32, #tpu.memory_space<smem>>
    %c0_i32 = arith.constant 0 : i32
    %c0_i32_0 = arith.constant 0 : i32
    return %1, %c0_i32 : i32, i32
  }
  func.func @transform_3(%arg0: i32, %arg1: memref<6xi32, #tpu.memory_space<smem>>, %arg2: memref<6xi32, #tpu.memory_space<smem>>) -> (i32, i32) {
    %0 = arith.index_cast %arg0 : i32 to index
    %1 = memref.load %arg1[%0] : memref<6xi32, #tpu.memory_space<smem>>
    %c0_i32 = arith.constant 0 : i32
    %c0_i32_0 = arith.constant 0 : i32
    return %1, %c0_i32 : i32, i32
  }
  func.func @transform_4(%arg0: i32, %arg1: memref<6xi32, #tpu.memory_space<smem>>, %arg2: memref<6xi32, #tpu.memory_space<smem>>) -> (i32, i32) {
    %c0_i32 = arith.constant 0 : i32
    %c0_i32_0 = arith.constant 0 : i32
    %c0_i32_1 = arith.constant 0 : i32
    return %c0_i32, %c0_i32_0 : i32, i32
  }
  func.func @transform_5(%arg0: i32, %arg1: memref<6xi32, #tpu.memory_space<smem>>, %arg2: memref<6xi32, #tpu.memory_space<smem>>) -> (i32, i32) {
    %0 = arith.index_cast %arg0 : i32 to index
    %1 = memref.load %arg1[%0] : memref<6xi32, #tpu.memory_space<smem>>
    %c0_i32 = arith.constant 0 : i32
    %c0_i32_0 = arith.constant 0 : i32
    return %1, %c0_i32 : i32, i32
  }
}

</mosaic_0001>

<llo_original>
// kernel: ngcf_layer.1
$region0: #{ngcf_layer.1}
  #allocation0 [shape = 'u32[]', space=smem, size = 0x4, offset = 0x4, fixed_abs, tag = 'smem constant byte address 0x4 - core index']
  #allocation1 [shape = 'u32[144,128]{1,0:T(1,128)}', space=vmem, size = 0x12000, scoped, tag = 'internal scratch']
  #allocation2 [shape = 'f32[128,32]{1,0:T(8,128)}', space=vmem, size = 0x10000, scoped, tag = 'scratch operand']
  #allocation3 [shape = 's32[1]{0}', space=sflag, size = 0x4, scoped, tag = 'scoped memory for ngcf_layer.1']
  #allocation4 [shape = 'u8[512]{0}', space=smem, size = 0x200, scoped, tag = 'prefetched SMEM operand 0']
  #allocation5 [shape = 'u8[512]{0}', space=smem, size = 0x200, scoped, tag = 'prefetched SMEM operand 1']
  %s0 = inlined_call_operand.vmem [shape: s32[6], index: 0, kind: input, shape index: {}]
  %s1 = inlined_call_operand.vmem [shape: s32[6], index: 1, kind: input, shape index: {}]
  %s2 = inlined_call_operand.vmem [shape: s8[512,512], index: 2, kind: input, shape index: {}]
  %s3 = inlined_call_operand.vmem [shape: bf16[512,32], index: 3, kind: input, shape index: {}]
  %s4 = inlined_call_operand.vmem [shape: f32[512,32], index: 4, kind: input, shape index: {}]
  %s5 = inlined_call_operand.vmem [shape: f32[512,1], index: 5, kind: input, shape index: {}]
  %s6 = inlined_call_operand.vmem [shape: bf16[64,32], index: 6, kind: input, shape index: {}]
  %s7 = inlined_call_operand.vmem [shape: f32[512,32], index: 7, kind: output, shape index: {}]
  %s8 = sld [smem:[#allocation0]]
  $region99: #{ngcf_layer.1} parent=0
    _
  %s10 = ssub.s32 1, %s8
  %s11 = scalar_select 0, %s10, %s8
  %s12 = sshll.u32 %s0, 4
  %s13 = int_to_ptr.vmem [resolvable:$true] %s12
  %15 = dma.vmem_to_smem %s13, 16, [#allocation4], [#allocation3]
  %s16 = sshll.u32 %s1, 4
  %s17 = int_to_ptr.vmem [resolvable:$true] %s16
  %19 = dma.vmem_to_smem %s17, 16, [#allocation5], [#allocation3]
  %20 = dma.done [#allocation3], 32
  %21 = sfence
  $region1: #{ngcf_layer.1} parent=0
    #allocation6 [shape = 'u8[32768]{0}', space=vmem, size = 0x8000, scoped, tag = 'input window, operand 2']
    loop: start=0, step=1, limit=8
    $region2: #{ngcf_layer.1} parent=1 // loop_pre_header
      _
    $region3: #{ngcf_layer.1} parent=1 // loop_header
      %s23 = sphi 0, %s27
      %p24 = scmp.ge.s32.totalorder %s23, 8
      %s39 = sphi 0, %s41
      %s42 = sphi 0, %s39
      %s43 = sphi 0, %s42
      %s59 = sphi 0, %s43
      %s67 = sphi 0, %s69
      %s70 = sphi 0, %s67
      %s71 = sphi 0, %s70
      %s87 = sphi 0, %s71
      %s95 = sphi 0, %s97
      %s98 = sphi 0, %s95
      %s99 = sphi 0, %s98
      %s115 = sphi 0, %s99
      %s123 = sphi 0, %s125
      %s126 = sphi 0, %s123
      %s127 = sphi 0, %s126
      %s143 = sphi 0, %s127
      %s147 = sphi 0, %s147
      %s149 = sphi 0, %s147
      %s150 = sphi 0, %s149
      %s164 = sphi 0, %s150
      %s172 = sphi 0, %s174
      %s175 = sphi 0, %s172
      %s176 = sphi 0, %s175
      %s192 = sphi 0, %s176
    $region4: #{ngcf_layer.1} parent=1 // loop_header_branch
      %26 = sbr.rel (%p24) target = $region8
    $region5: #{ngcf_layer.1} parent=1 // loop_body
      %s28 = ssub.s32 %s23, 1
      %s29 = ssub.s32 %s23, 2
      %s30 = sadd.s32 %s23, 1
      %s31 = sld [smem:[#allocation4 + %s23]]
      %s32 = sld [smem:[#allocation5 + %s23]]
      %s33 = sld [smem:[#allocation4 + %s30]]
      %s34 = sld [smem:[#allocation5 + %s30]]
      %s35 = ssub.s32 %s31, %s33
      %s36 = ssub.s32 %s32, %s34
      %s37 = sor.u32 %s35, %s36
      %p38 = scmp.eq.s32.totalorder %s37, 0
      %s40 = sadd.s32 %s39, 1
      %s41 = scalar_select %p38, %s39, %s40
      %p44 = pneg %p38
      %p45 = scmp.eq.s32.totalorder %s23, 5
      %p46 = por %p44, %p45
      %p47 = scmp.ne.s32.totalorder %s39, %s42
      %p48 = scmp.eq.s32.totalorder %s23, 0
      %p49 = por %p47, %p48
      %p50 = scmp.ne.s32.totalorder %s39, %s42
      %p51 = scmp.eq.s32.totalorder %s28, 5
      %p52 = por %p50, %p51
      %p53 = scmp.ne.s32.totalorder %s42, %s43
      %p54 = scmp.eq.s32.totalorder %s28, 0
      %p55 = por %p53, %p54
      %p56 = scmp.ne.s32.totalorder %s42, %s43
      %p57 = scmp.eq.s32.totalorder %s29, 5
      %p58 = por %p56, %p57
      %p60 = scmp.ne.s32.totalorder %s43, %s59
      %p61 = scmp.eq.s32.totalorder %s29, 0
      %p62 = por %p60, %p61
      %s63 = sld [smem:[#allocation5 + %s23]]
      %s64 = sld [smem:[#allocation5 + %s30]]
      %s65 = ssub.s32 %s63, %s64
      %p66 = scmp.eq.s32.totalorder %s65, 0
      %s68 = sadd.s32 %s67, 1
      %s69 = scalar_select %p66, %s67, %s68
      %p72 = pneg %p66
      %p73 = scmp.eq.s32.totalorder %s23, 5
      %p74 = por %p72, %p73
      %p75 = scmp.ne.s32.totalorder %s67, %s70
      %p76 = scmp.eq.s32.totalorder %s23, 0
      %p77 = por %p75, %p76
      %p78 = scmp.ne.s32.totalorder %s67, %s70
      %p79 = scmp.eq.s32.totalorder %s28, 5
      %p80 = por %p78, %p79
      %p81 = scmp.ne.s32.totalorder %s70, %s71
      %p82 = scmp.eq.s32.totalorder %s28, 0
      %p83 = por %p81, %p82
      %p84 = scmp.ne.s32.totalorder %s70, %s71
      %p85 = scmp.eq.s32.totalorder %s29, 5
      %p86 = por %p84, %p85
      %p88 = scmp.ne.s32.totalorder %s71, %s87
      %p89 = scmp.eq.s32.totalorder %s29, 0
      %p90 = por %p88, %p89
      %s91 = sld [smem:[#allocation4 + %s23]]
      %s92 = sld [smem:[#allocation4 + %s30]]
      %s93 = ssub.s32 %s91, %s92
      %p94 = scmp.eq.s32.totalorder %s93, 0
      %s96 = sadd.s32 %s95, 1
      %s97 = scalar_select %p94, %s95, %s96
      %p100 = pneg %p94
      %p101 = scmp.eq.s32.totalorder %s23, 5
      %p102 = por %p100, %p101
      %p103 = scmp.ne.s32.totalorder %s95, %s98
      %p104 = scmp.eq.s32.totalorder %s23, 0
      %p105 = por %p103, %p104
      %p106 = scmp.ne.s32.totalorder %s95, %s98
      %p107 = scmp.eq.s32.totalorder %s28, 5
      %p108 = por %p106, %p107
      %p109 = scmp.ne.s32.totalorder %s98, %s99
      %p110 = scmp.eq.s32.totalorder %s28, 0
      %p111 = por %p109, %p110
      %p112 = scmp.ne.s32.totalorder %s98, %s99
      %p113 = scmp.eq.s32.totalorder %s29, 5
      %p114 = por %p112, %p113
      %p116 = scmp.ne.s32.totalorder %s99, %s115
      %p117 = scmp.eq.s32.totalorder %s29, 0
      %p118 = por %p116, %p117
      %s119 = sld [smem:[#allocation4 + %s23]]
      %s120 = sld [smem:[#allocation4 + %s30]]
      %s121 = ssub.s32 %s119, %s120
      %p122 = scmp.eq.s32.totalorder %s121, 0
      %s124 = sadd.s32 %s123, 1
      %s125 = scalar_select %p122, %s123, %s124
      %p128 = pneg %p122
      %p129 = scmp.eq.s32.totalorder %s23, 5
      %p130 = por %p128, %p129
      %p131 = scmp.ne.s32.totalorder %s123, %s126
      %p132 = scmp.eq.s32.totalorder %s23, 0
      %p133 = por %p131, %p132
      %p134 = scmp.ne.s32.totalorder %s123, %s126
      %p135 = scmp.eq.s32.totalorder %s28, 5
      %p136 = por %p134, %p135
      %p137 = scmp.ne.s32.totalorder %s126, %s127
      %p138 = scmp.eq.s32.totalorder %s28, 0
      %p139 = por %p137, %p138
      %p140 = scmp.ne.s32.totalorder %s126, %s127
      %p141 = scmp.eq.s32.totalorder %s29, 5
      %p142 = por %p140, %p141
      %p144 = scmp.ne.s32.totalorder %s127, %s143
      %p145 = scmp.eq.s32.totalorder %s29, 0
      %p146 = por %p144, %p145
      %s148 = sadd.s32 %s147, 1
      %p151 = scmp.eq.s32.totalorder %s23, 5
      %p152 = scmp.ne.s32.totalorder %s147, %s149
      %p153 = scmp.eq.s32.totalorder %s23, 0
      %p154 = por %p152, %p153
      %p155 = scmp.ne.s32.totalorder %s147, %s149
      %p156 = scmp.eq.s32.totalorder %s28, 5
      %p157 = por %p155, %p156
      %p158 = scmp.ne.s32.totalorder %s149, %s150
      %p159 = scmp.eq.s32.totalorder %s28, 0
      %p160 = por %p158, %p159
      %p161 = scmp.ne.s32.totalorder %s149, %s150
      %p162 = scmp.eq.s32.totalorder %s29, 5
      %p163 = por %p161, %p162
      %p165 = scmp.ne.s32.totalorder %s150, %s164
      %p166 = scmp.eq.s32.totalorder %s29, 0
      %p167 = por %p165, %p166
      %s168 = sld [smem:[#allocation4 + %s23]]
      %s169 = sld [smem:[#allocation4 + %s30]]
      %s170 = ssub.s32 %s168, %s169
      %p171 = scmp.eq.s32.totalorder %s170, 0
      %s173 = sadd.s32 %s172, 1
      %s174 = scalar_select %p171, %s172, %s173
      %p177 = pneg %p171
      %p178 = scmp.eq.s32.totalorder %s23, 5
      %p179 = por %p177, %p178
      %p180 = scmp.ne.s32.totalorder %s172, %s175
      %p181 = scmp.eq.s32.totalorder %s23, 0
      %p182 = por %p180, %p181
      %p183 = scmp.ne.s32.totalorder %s172, %s175
      %p184 = scmp.eq.s32.totalorder %s28, 5
      %p185 = por %p183, %p184
      %p186 = scmp.ne.s32.totalorder %s175, %s176
      %p187 = scmp.eq.s32.totalorder %s28, 0
      %p188 = por %p186, %p187
      %p189 = scmp.ne.s32.totalorder %s175, %s176
      %p190 = scmp.eq.s32.totalorder %s29, 5
      %p191 = por %p189, %p190
      %p193 = scmp.ne.s32.totalorder %s176, %s192
      %p194 = scmp.eq.s32.totalorder %s29, 0
      %p195 = por %p193, %p194
      %p196 = scmp.le.s32.totalorder 1, %s23
      %p197 = scmp.lt.s32.totalorder %s23, 7
      %p198 = pnand %p196, %p197
      %p199 = pneg %p198
      // Predicated region
      $region9: #{ngcf_layer.1} parent=5 // pred_check
        _
      $region10: #{ngcf_layer.1} parent=5 // pred_check_branch
        %201 = sbr.rel (%p198) target = $region12
      $region11: #{ngcf_layer.1} parent=5 // pred_region
        %s202 = ssub.s32 %s23, 1
        // Predicated region
        $region13: #{ngcf_layer.1} parent=11 // pred_check
          %p203 = pneg %p160
        $region14: #{ngcf_layer.1} parent=11 // pred_check_branch
          %205 = sbr.rel (%p203) target = $region16
        $region15: #{ngcf_layer.1} parent=11 // pred_region
          _
        $region16: #{ngcf_layer.1} parent=11 // pred_fallthru
          _
      $region12: #{ngcf_layer.1} parent=5 // pred_fallthru
        _
      %p206 = scmp.lt.s32.totalorder %s23, 6
      // Predicated region
      $region17: #{ngcf_layer.1} parent=5 // pred_check
        %p207 = pneg %p206
      $region18: #{ngcf_layer.1} parent=5 // pred_check_branch
        %209 = sbr.rel (%p207) target = $region20
      $region19: #{ngcf_layer.1} parent=5 // pred_region
        // Predicated region
        $region21: #{ngcf_layer.1} parent=19 // pred_check
          %p210 = pneg %p49
        $region22: #{ngcf_layer.1} parent=19 // pred_check_branch
          %212 = sbr.rel (%p210) target = $region24
        $region23: #{ngcf_layer.1} parent=19 // pred_region
          %s213 = sand.u32 %s39, 1
          %s214 = sand.u32 %s39, 1
          %s215 = smul.addr %s214, 32
          %s216 = scalar_lea.vmem [#allocation6], %s215
          %s217 = sld [smem:[#allocation4 + %s23]]
          %s218 = sld [smem:[#allocation5 + %s23]]
          %s219 = smul.u32 4, %s217
          %s220 = smul.addr %s219, 4
          %s221 = sadd.s32 %s218, %s220
          %s222 = smul.addr %s221, 8
          %s223 = scalar_lea.vmem %s2, %s222
          // Predicated region
          $region25: #{ngcf_layer.1} parent=23 // pred_check
            _
          $region26: #{ngcf_layer.1} parent=23 // pred_check_branch
            %225 = sbr.rel (0) target = $region28
          $region27: #{ngcf_layer.1} parent=23 // pred_region
            // Predicated region
            $region29: #{ngcf_layer.1} parent=27 // pred_check
              _
            $region30: #{ngcf_layer.1} parent=27 // pred_check_branch
              %227 = sbr.rel (0) target = $region32
            $region31: #{ngcf_layer.1} parent=27 // pred_region
              // Predicated region
              $region44: #{ngcf_layer.1} parent=31 // pred_check
                _
              $region45: #{ngcf_layer.1} parent=31 // pred_check_branch
                %248 = sbr.rel (0) target = $region47
              $region46: #{ngcf_layer.1} parent=31 // pred_region
                loop: start=0, step=1, limit=1
                $region48: #{ngcf_layer.1} parent=46 // loop_pre_header
                  _
                $region49: #{ngcf_layer.1} parent=46 // loop_header
                  %s250 = sphi 0, %s254
                  %p251 = scmp.ge.s32.totalorder %s250, 1
                  %s255 = sphi %s223, %s223
                  %s256 = sphi %s216, %s216
                $region50: #{ngcf_layer.1} parent=46 // loop_header_branch
                  %253 = sbr.rel (%p251) target = $region54
                $region51: #{ngcf_layer.1} parent=46 // loop_body
                  %v257 = vld [vmem:[%s255] sm:$0xff]
                  %258 = vst [vmem:[%s256] sm:$0xff] %v257
                  %v259 = vld [vmem:[%s255 + $0x20] sm:$0xff]
                  %260 = vst [vmem:[%s256 + $0x8] sm:$0xff] %v259
                  %v261 = vld [vmem:[%s255 + $0x40] sm:$0xff]
                  %262 = vst [vmem:[%s256 + $0x10] sm:$0xff] %v261
                  %v263 = vld [vmem:[%s255 + $0x60] sm:$0xff]
                  %264 = vst [vmem:[%s256 + $0x18] sm:$0xff] %v263
                $region52: #{ngcf_layer.1} parent=46 // loop_footer
                  %s254 = sadd.s32 1, %s250
                $region53: #{ngcf_layer.1} parent=46 // loop_footer_branch
                  %249 = sbr.rel target = $region49
                $region54: #{ngcf_layer.1} parent=46 // loop_exit
                  _
              $region47: #{ngcf_layer.1} parent=31 // pred_fallthru
                _
              // Predicated region
              $region55: #{ngcf_layer.1} parent=31 // pred_check
                _
              $region56: #{ngcf_layer.1} parent=31 // pred_check_branch
                %266 = sbr.rel target = $region58
              $region57: #{ngcf_layer.1} parent=31 // pred_region
                _
              $region58: #{ngcf_layer.1} parent=31 // pred_fallthru
                _
            $region32: #{ngcf_layer.1} parent=27 // pred_fallthru
              _
            // Predicated region
            $region33: #{ngcf_layer.1} parent=27 // pred_check
              _
            $region34: #{ngcf_layer.1} parent=27 // pred_check_branch
              %229 = sbr.rel target = $region36
            $region35: #{ngcf_layer.1} parent=27 // pred_region
              loop: start=0, step=1, limit=1
              $region37: #{ngcf_layer.1} parent=35 // loop_pre_header
                _
              $region38: #{ngcf_layer.1} parent=35 // loop_header
                %s232 = sphi 0, %s236
                %p233 = scmp.ge.s32.totalorder %s232, 1
                %s237 = sphi %s223, %s223
                %s238 = sphi %s216, %s216
              $region39: #{ngcf_layer.1} parent=35 // loop_header_branch
                %235 = sbr.rel (%p233) target = $region43
              $region40: #{ngcf_layer.1} parent=35 // loop_body
                %v239 = vld [vmem:[%s237] sm:$0xff]
                %240 = vst [vmem:[%s238] sm:$0xff] %v239
                %v241 = vld [vmem:[%s237 + $0x20] sm:$0xff]
                %242 = vst [vmem:[%s238 + $0x8] sm:$0xff] %v241
                %v243 = vld [vmem:[%s237 + $0x40] sm:$0xff]
                %244 = vst [vmem:[%s238 + $0x10] sm:$0xff] %v243
                %v245 = vld [vmem:[%s237 + $0x60] sm:$0xff]
                %246 = vst [vmem:[%s238 + $0x18] sm:$0xff] %v245
              $region41: #{ngcf_layer.1} parent=35 // loop_footer
                %s236 = sadd.s32 1, %s232
              $region42: #{ngcf_layer.1} parent=35 // loop_footer_branch
                %231 = sbr.rel target = $region38
              $region43: #{ngcf_layer.1} parent=35 // loop_exit
                _
            $region36: #{ngcf_layer.1} parent=27 // pred_fallthru
              _
          $region28: #{ngcf_layer.1} parent=23 // pred_fallthru
            _
          %267 = vnop
        $region24: #{ngcf_layer.1} parent=19 // pred_fallthru
          _
        // Predicated region
        $region59: #{ngcf_layer.1} parent=19 // pred_check
          %p268 = pneg %p77
        $region60: #{ngcf_layer.1} parent=19 // pred_check_branch
          %270 = sbr.rel (%p268) target = $region62
        $region61: #{ngcf_layer.1} parent=19 // pred_region
          %s271 = sld [smem:[#allocation5 + %s23]]
          %s272 = smul.u32 16, %s271
          %p273 = scmp.lt.s32.totalorder %s272, 63
          %s274 = scalar_select %p273, %s272, 63
          %s275 = smul.addr %s274, 4
          %s276 = scalar_lea.vmem %s3, %s275
          %s277 = sld [smem:[#allocation5 + %s23]]
          %s278 = smul.u32 16, %s277
        $region62: #{ngcf_layer.1} parent=19 // pred_fallthru
          _
        // Predicated region
        $region63: #{ngcf_layer.1} parent=19 // pred_check
          %p279 = pneg %p105
        $region64: #{ngcf_layer.1} parent=19 // pred_check_branch
          %281 = sbr.rel (%p279) target = $region66
        $region65: #{ngcf_layer.1} parent=19 // pred_region
          %s282 = sld [smem:[#allocation4 + %s23]]
          %s283 = smul.u32 16, %s282
          %p284 = scmp.lt.s32.totalorder %s283, 63
          %s285 = scalar_select %p284, %s283, 63
          %s286 = smul.addr %s285, 8
          %s287 = scalar_lea.vmem %s4, %s286
          %s288 = sld [smem:[#allocation4 + %s23]]
          %s289 = smul.u32 16, %s288
        $region66: #{ngcf_layer.1} parent=19 // pred_fallthru
          _
        // Predicated region
        $region67: #{ngcf_layer.1} parent=19 // pred_check
          %p290 = pneg %p133
        $region68: #{ngcf_layer.1} parent=19 // pred_check_branch
          %292 = sbr.rel (%p290) target = $region70
        $region69: #{ngcf_layer.1} parent=19 // pred_region
          %s293 = sld [smem:[#allocation4 + %s23]]
          %s294 = smul.u32 16, %s293
          %p295 = scmp.lt.s32.totalorder %s294, 63
          %s296 = scalar_select %p295, %s294, 63
          %s297 = smul.addr %s296, 8
          %s298 = scalar_lea.vmem %s5, %s297
          %s299 = sld [smem:[#allocation4 + %s23]]
          %s300 = smul.u32 16, %s299
        $region70: #{ngcf_layer.1} parent=19 // pred_fallthru
          _
      $region20: #{ngcf_layer.1} parent=5 // pred_fallthru
        _
      %p301 = scmp.le.s32.totalorder 1, %s23
      %p302 = scmp.lt.s32.totalorder %s23, 7
      %p303 = pnand %p301, %p302
      %p304 = pneg %p303
      // Predicated region
      $region71: #{ngcf_layer.1} parent=5 // pred_check
        _
      $region72: #{ngcf_layer.1} parent=5 // pred_check_branch
        %306 = sbr.rel (%p303) target = $region74
      $region73: #{ngcf_layer.1} parent=5 // pred_region
        %s307 = ssub.s32 %s23, 1
        %s308 = sand.u32 %s42, 1
        %s309 = sand.u32 %s42, 1
        %s310 = smul.addr %s309, 32
        %s311 = scalar_lea.vmem [#allocation6], %s310
        // Predicated region
        $region75: #{ngcf_layer.1} parent=73 // pred_check
          %p312 = pneg %p55
        $region76: #{ngcf_layer.1} parent=73 // pred_check_branch
          %314 = sbr.rel (%p312) target = $region78
        $region77: #{ngcf_layer.1} parent=73 // pred_region
          _
        $region78: #{ngcf_layer.1} parent=73 // pred_fallthru
          _
        %s315 = sand.u32 %s42, 1
        %s316 = sand.u32 %s42, 1
        %s317 = smul.addr %s316, 32
        %s318 = scalar_lea.vmem [#allocation6], %s317
        %p319 = pneg %p55
        %p320 = pneg %p52
        %s321 = sld [smem:[#allocation5 + %s28]]
        %s322 = smul.u32 16, %s321
        %p323 = scmp.lt.s32.totalorder %s322, 63
        %s324 = scalar_select %p323, %s322, 63
        %s325 = smul.addr %s324, 4
        %s326 = scalar_lea.vmem %s3, %s325
        %p327 = pneg %p83
        %p328 = pneg %p80
        %s329 = sld [smem:[#allocation4 + %s28]]
        %s330 = smul.u32 16, %s329
        %p331 = scmp.lt.s32.totalorder %s330, 63
        %s332 = scalar_select %p331, %s330, 63
        %s333 = smul.addr %s332, 8
        %s334 = scalar_lea.vmem %s4, %s333
        %p335 = pneg %p111
        %p336 = pneg %p108
        %s337 = sld [smem:[#allocation4 + %s28]]
        %s338 = smul.u32 16, %s337
        %p339 = scmp.lt.s32.totalorder %s338, 63
        %s340 = scalar_select %p339, %s338, 63
        %s341 = smul.addr %s340, 8
        %s342 = scalar_lea.vmem %s5, %s341
        %p343 = pneg %p139
        %p344 = pneg %p136
        %p345 = pneg %p160
        %p346 = pneg %p157
        %p347 = pneg %p188
        %p348 = pneg %p185
        %s349 = sld [smem:[#allocation4 + %s28]]
        %s350 = smul.u32 16, %s349
        %p351 = scmp.lt.s32.totalorder %s350, 63
        %s352 = scalar_select %p351, %s350, 63
        %s353 = smul.addr %s352, 8
        %s354 = scalar_lea.vmem %s7, %s353
        %s355 = sld [smem:[#allocation4 + %s28]]
        %s356 = sld [smem:[#allocation5 + %s28]]
        %s357 = smul.u32 4, %s355
        %s358 = sld [smem:[#allocation5 + %s28]]
        %s359 = smul.u32 16, %s358
        %p360 = scmp.lt.s32.totalorder %s359, 63
        %s361 = scalar_select %p360, %s359, 63
        %s362 = smul.addr %s361, 4
        %s363 = scalar_lea.vmem %s3, %s362
        %s364 = sld [smem:[#allocation5 + %s28]]
        %s365 = smul.u32 16, %s364
        %s366 = sld [smem:[#allocation4 + %s28]]
        %s367 = smul.u32 16, %s366
        %p368 = scmp.lt.s32.totalorder %s367, 63
        %s369 = scalar_select %p368, %s367, 63
        %s370 = smul.addr %s369, 8
        %s371 = scalar_lea.vmem %s4, %s370
        %s372 = sld [smem:[#allocation4 + %s28]]
        %s373 = smul.u32 16, %s372
        %s374 = sld [smem:[#allocation4 + %s28]]
        %s375 = smul.u32 16, %s374
        %p376 = scmp.lt.s32.totalorder %s375, 63
        %s377 = scalar_select %p376, %s375, 63
        %s378 = smul.addr %s377, 8
        %s379 = scalar_lea.vmem %s5, %s378
        %s380 = sld [smem:[#allocation4 + %s28]]
        %s381 = smul.u32 16, %s380
        %s382 = sld [smem:[#allocation4 + %s28]]
        %s383 = smul.u32 16, %s382
        %p384 = scmp.lt.s32.totalorder %s383, 63
        %s385 = scalar_select %p384, %s383, 63
        %s386 = smul.addr %s385, 8
        %s387 = scalar_lea.vmem %s7, %s386
        %s388 = sld [smem:[#allocation4 + %s28]]
        %s389 = smul.u32 16, %s388
        %s391 = sld [smem:[#allocation4 + %s28]]
        %s392 = ssub.s32 %s28, 1
        %p393 = scmp.gt.s32.totalorder %s392, 0
        %s394 = scalar_select %p393, %s392, 0
        %s395 = sld [smem:[#allocation4 + %s394]]
        %s396 = sadd.s32 %s28, 1
        %p397 = scmp.lt.s32.totalorder %s396, 5
        %s398 = scalar_select %p397, %s396, 5
        %s399 = sld [smem:[#allocation4 + %s398]]
        %p400 = scmp.eq.s32.totalorder %s28, 0
        %p401 = scmp.ne.s32.totalorder %s391, %s395
        %p402 = por %p400, %p401
        // Predicated region
        $region79: #{ngcf_layer.1} parent=73 // pred_check
          %p403 = pneg %p402
        $region80: #{ngcf_layer.1} parent=73 // pred_check_branch
          %405 = sbr.rel (%p403) target = $region82
        $region81: #{ngcf_layer.1} parent=73 // pred_region
          %vm406 = vcmask 261120
          %407 = vst.msk [vmem:[#allocation2] sm:$0xff] %vm406, 0.0
          %408 = vst.msk [vmem:[#allocation2 + $0x8] sm:$0xff] %vm406, 0.0
          %409 = vst.msk [vmem:[#allocation2 + $0x10] sm:$0xff] %vm406, 0.0
          %410 = vst.msk [vmem:[#allocation2 + $0x18] sm:$0xff] %vm406, 0.0
          %411 = vst.msk [vmem:[#allocation2 + $0x20] sm:$0xff] %vm406, 0.0
          %412 = vst.msk [vmem:[#allocation2 + $0x28] sm:$0xff] %vm406, 0.0
          %413 = vst.msk [vmem:[#allocation2 + $0x30] sm:$0xff] %vm406, 0.0
          %414 = vst.msk [vmem:[#allocation2 + $0x38] sm:$0xff] %vm406, 0.0
          %415 = vst.msk [vmem:[#allocation2 + $0x40] sm:$0xff] %vm406, 0.0
          %416 = vst.msk [vmem:[#allocation2 + $0x48] sm:$0xff] %vm406, 0.0
          %417 = vst.msk [vmem:[#allocation2 + $0x50] sm:$0xff] %vm406, 0.0
          %418 = vst.msk [vmem:[#allocation2 + $0x58] sm:$0xff] %vm406, 0.0
          %419 = vst.msk [vmem:[#allocation2 + $0x60] sm:$0xff] %vm406, 0.0
          %420 = vst.msk [vmem:[#allocation2 + $0x68] sm:$0xff] %vm406, 0.0
          %421 = vst.msk [vmem:[#allocation2 + $0x70] sm:$0xff] %vm406, 0.0
          %422 = vst.msk [vmem:[#allocation2 + $0x78] sm:$0xff] %vm406, 0.0
        $region82: #{ngcf_layer.1} parent=73 // pred_fallthru
          _
        %v423 = vld [vmem:[%s311] sm:$0xff]
        %v424 = vld [vmem:[%s311 + $0x8] sm:$0xff]
        %v425 = vld [vmem:[%s311 + $0x10] sm:$0xff]
        %v426 = vld [vmem:[%s311 + $0x18] sm:$0xff]
        %v427 = vunpack.c.l.s8.bf16 %v423
        %v428 = vunpack.c.h.s8.bf16 %v423
        %v429 = vunpack.c.l.s8.bf16 %v424
        %v430 = vunpack.c.h.s8.bf16 %v424
        %v431 = vunpack.c.l.s8.bf16 %v425
        %v432 = vunpack.c.h.s8.bf16 %v425
        %v433 = vunpack.c.l.s8.bf16 %v426
        %v434 = vunpack.c.h.s8.bf16 %v426
        %v435 = vld [vmem:[#allocation2] sm:$0xff]
        %v436 = vld [vmem:[#allocation2 + $0x8] sm:$0xff]
        %v437 = vld [vmem:[#allocation2 + $0x10] sm:$0xff]
        %v438 = vld [vmem:[#allocation2 + $0x18] sm:$0xff]
        %v439 = vld [vmem:[#allocation2 + $0x20] sm:$0xff]
        %v440 = vld [vmem:[#allocation2 + $0x28] sm:$0xff]
        %v441 = vld [vmem:[#allocation2 + $0x30] sm:$0xff]
        %v442 = vld [vmem:[#allocation2 + $0x38] sm:$0xff]
        %v443 = vld [vmem:[#allocation2 + $0x40] sm:$0xff]
        %v444 = vld [vmem:[#allocation2 + $0x48] sm:$0xff]
        %v445 = vld [vmem:[#allocation2 + $0x50] sm:$0xff]
        %v446 = vld [vmem:[#allocation2 + $0x58] sm:$0xff]
        %v447 = vld [vmem:[#allocation2 + $0x60] sm:$0xff]
        %v448 = vld [vmem:[#allocation2 + $0x68] sm:$0xff]
        %v449 = vld [vmem:[#allocation2 + $0x70] sm:$0xff]
        %v450 = vld [vmem:[#allocation2 + $0x78] sm:$0xff]
        %v451 = vld [vmem:[%s363] sm:$0xf]
        %v452 = vld [vmem:[%s363 + $0x4] sm:$0xf]
        %v453 = vld [vmem:[%s363 + $0x8] sm:$0xf]
        %v454 = vld [vmem:[%s363 + $0xc] sm:$0xf]
        %v455 = vld [vmem:[%s363 + $0x10] sm:$0xf]
        %v456 = vld [vmem:[%s363 + $0x14] sm:$0xf]
        %v457 = vld [vmem:[%s363 + $0x18] sm:$0xf]
        %v458 = vld [vmem:[%s363 + $0x1c] sm:$0xf]
        %v459 = vld [vmem:[%s363 + $0x20] sm:$0xf]
        %v460 = vld [vmem:[%s363 + $0x24] sm:$0xf]
        %v461 = vld [vmem:[%s363 + $0x28] sm:$0xf]
        %v462 = vld [vmem:[%s363 + $0x2c] sm:$0xf]
        %v463 = vld [vmem:[%s363 + $0x30] sm:$0xf]
        %v464 = vld [vmem:[%s363 + $0x34] sm:$0xf]
        %v465 = vld [vmem:[%s363 + $0x38] sm:$0xf]
        %v466 = vld [vmem:[%s363 + $0x3c] sm:$0xf]
        %v483 = vunpack.c.l.b16 %v451
        %v484 = vunpack.c.l.b16 %v452
        %v485 = vunpack.c.l.b16 %v453
        %v486 = vunpack.c.l.b16 %v454
        %v487 = vunpack.c.l.b16 %v455
        %v488 = vunpack.c.l.b16 %v456
        %v489 = vunpack.c.l.b16 %v457
        %v490 = vunpack.c.l.b16 %v458
        %v491 = vunpack.c.l.b16 %v459
        %v492 = vunpack.c.l.b16 %v460
        %v493 = vunpack.c.l.b16 %v461
        %v494 = vunpack.c.l.b16 %v462
        %v495 = vunpack.c.l.b16 %v463
        %v496 = vunpack.c.l.b16 %v464
        %v497 = vunpack.c.l.b16 %v465
        %v498 = vunpack.c.l.b16 %v466
        %v499 = vpack.c.b16 %v484, %v483
        %v500 = vpack.c.b16 %v486, %v485
        %v501 = vpack.c.b16 %v488, %v487
        %v502 = vpack.c.b16 %v490, %v489
        %v503 = vpack.c.b16 %v492, %v491
        %v504 = vpack.c.b16 %v494, %v493
        %v505 = vpack.c.b16 %v496, %v495
        %v506 = vpack.c.b16 %v498, %v497
        %515 = vmatprep.subr.bf16.mxu0 0
        %516 = vmatpush1.bf16.msra.mxu0 %v499
        %517 = vmatprep.subr.bf16.mxu0 0
        %518 = vmatpush1.bf16.msra.mxu0 %v500
        %519 = vmatprep.subr.bf16.mxu0 0
        %520 = vmatpush1.bf16.msra.mxu0 %v501
        %521 = vmatprep.subr.bf16.mxu0 0
        %522 = vmatpush1.bf16.msra.mxu0 %v502
        %523 = vmatprep.subr.bf16.mxu0 0
        %524 = vmatpush1.bf16.msra.mxu0 %v503
        %525 = vmatprep.subr.bf16.mxu0 0
        %526 = vmatpush1.bf16.msra.mxu0 %v504
        %527 = vmatprep.subr.bf16.mxu0 0
        %528 = vmatpush1.bf16.msra.mxu0 %v505
        %529 = vmatprep.subr.bf16.mxu0 0
        %530 = vmatpush1.bf16.msra.mxu0 %v506
        %531 = vmatprep.subr.bf16.mxu0 0
        %532 = vmatpush1.bf16.msra.mxu0 0
        %533 = vmatprep.subr.bf16.mxu0 0
        %534 = vmatpush1.bf16.msra.mxu0 0
        %535 = vmatprep.subr.bf16.mxu0 0
        %536 = vmatpush1.bf16.msra.mxu0 0
        %537 = vmatprep.subr.bf16.mxu0 0
        %538 = vmatpush1.bf16.msra.mxu0 0
        %539 = vmatprep.subr.bf16.mxu0 0
        %540 = vmatpush1.bf16.msra.mxu0 0
        %541 = vmatprep.subr.bf16.mxu0 0
        %542 = vmatpush1.bf16.msra.mxu0 0
        %543 = vmatprep.subr.bf16.mxu0 0
        %544 = vmatpush1.bf16.msra.mxu0 0
        %545 = vmatprep.subr.bf16.mxu0 0
        %546 = vmatpush1.bf16.msra.mxu0 0
        %547 = vmatprep.mubr.bf16.mxu0 0
        %548 = vmatmul.mubr.bf16.gmra.mrb[0].mxu0 %v427
        %v549 = vpop.f32.mrb[0].mxu0
        %v550 = vadd.f32 0.0, %v549
        %v551 = vpop.f32.mrb[0].mxu0
        %v552 = vpop.f32.mrb[0].mxu0
        %v553 = vadd.f32 0.0, %v552
        %v554 = vpop.f32.mrb[0].mxu0
        %555 = vmatprep.mubr.bf16.mxu0 0
        %556 = vmatmul.mubr.bf16.gmra.mrb[0].mxu0 %v428
        %v557 = vpop.f32.mrb[0].mxu0
        %v558 = vadd.f32 0.0, %v557
        %v559 = vpop.f32.mrb[0].mxu0
        %v560 = vpop.f32.mrb[0].mxu0
        %v561 = vadd.f32 0.0, %v560
        %v562 = vpop.f32.mrb[0].mxu0
        %563 = vmatprep.mubr.bf16.mxu0 0
        %564 = vmatmul.mubr.bf16.gmra.mrb[0].mxu0 %v429
        %v565 = vpop.f32.mrb[0].mxu0
        %v566 = vadd.f32 0.0, %v565
        %v567 = vpop.f32.mrb[0].mxu0
        %v568 = vpop.f32.mrb[0].mxu0
        %v569 = vadd.f32 0.0, %v568
        %v570 = vpop.f32.mrb[0].mxu0
        %571 = vmatprep.mubr.bf16.mxu0 0
        %572 = vmatmul.mubr.bf16.gmra.mrb[0].mxu0 %v430
        %v573 = vpop.f32.mrb[0].mxu0
        %v574 = vadd.f32 0.0, %v573
        %v575 = vpop.f32.mrb[0].mxu0
        %v576 = vpop.f32.mrb[0].mxu0
        %v577 = vadd.f32 0.0, %v576
        %v578 = vpop.f32.mrb[0].mxu0
        %579 = vmatprep.mubr.bf16.mxu0 0
        %580 = vmatmul.mubr.bf16.gmra.mrb[0].mxu0 %v431
        %v581 = vpop.f32.mrb[0].mxu0
        %v582 = vadd.f32 0.0, %v581
        %v583 = vpop.f32.mrb[0].mxu0
        %v584 = vpop.f32.mrb[0].mxu0
        %v585 = vadd.f32 0.0, %v584
        %v586 = vpop.f32.mrb[0].mxu0
        %587 = vmatprep.mubr.bf16.mxu0 0
        %588 = vmatmul.mubr.bf16.gmra.mrb[0].mxu0 %v432
        %v589 = vpop.f32.mrb[0].mxu0
        %v590 = vadd.f32 0.0, %v589
        %v591 = vpop.f32.mrb[0].mxu0
        %v592 = vpop.f32.mrb[0].mxu0
        %v593 = vadd.f32 0.0, %v592
        %v594 = vpop.f32.mrb[0].mxu0
        %595 = vmatprep.mubr.bf16.mxu0 0
        %596 = vmatmul.mubr.bf16.gmra.mrb[0].mxu0 %v433
        %v597 = vpop.f32.mrb[0].mxu0
        %v598 = vadd.f32 0.0, %v597
        %v599 = vpop.f32.mrb[0].mxu0
        %v600 = vpop.f32.mrb[0].mxu0
        %v601 = vadd.f32 0.0, %v600
        %v602 = vpop.f32.mrb[0].mxu0
        %603 = vmatprep.mubr.bf16.mxu0 0
        %604 = vmatmul.mubr.bf16.gmra.mrb[0].mxu0 %v434
        %v605 = vpop.f32.mrb[0].mxu0
        %v606 = vadd.f32 0.0, %v605
        %v607 = vpop.f32.mrb[0].mxu0
        %v608 = vpop.f32.mrb[0].mxu0
        %v609 = vadd.f32 0.0, %v608
        %v610 = vpop.f32.mrb[0].mxu0
        %611 = vdwg.mxu0
        %v612 = vadd.f32 %v435, %v550
        %v613 = vadd.f32 %v436, %v553
        %v614 = vadd.f32 %v437, %v558
        %v615 = vadd.f32 %v438, %v561
        %v616 = vadd.f32 %v439, %v566
        %v617 = vadd.f32 %v440, %v569
        %v618 = vadd.f32 %v441, %v574
        %v619 = vadd.f32 %v442, %v577
        %v620 = vadd.f32 %v443, %v582
        %v621 = vadd.f32 %v444, %v585
        %v622 = vadd.f32 %v445, %v590
        %v623 = vadd.f32 %v446, %v593
        %v624 = vadd.f32 %v447, %v598
        %v625 = vadd.f32 %v448, %v601
        %v626 = vadd.f32 %v449, %v606
        %v627 = vadd.f32 %v450, %v609
        %vm628 = vcmask 261120
        %629 = vst.msk [vmem:[#allocation2] sm:$0xff] %vm628, %v612
        %630 = vst.msk [vmem:[#allocation2 + $0x8] sm:$0xff] %vm628, %v613
        %631 = vst.msk [vmem:[#allocation2 + $0x10] sm:$0xff] %vm628, %v614
        %632 = vst.msk [vmem:[#allocation2 + $0x18] sm:$0xff] %vm628, %v615
        %633 = vst.msk [vmem:[#allocation2 + $0x20] sm:$0xff] %vm628, %v616
        %634 = vst.msk [vmem:[#allocation2 + $0x28] sm:$0xff] %vm628, %v617
        %635 = vst.msk [vmem:[#allocation2 + $0x30] sm:$0xff] %vm628, %v618
        %636 = vst.msk [vmem:[#allocation2 + $0x38] sm:$0xff] %vm628, %v619
        %637 = vst.msk [vmem:[#allocation2 + $0x40] sm:$0xff] %vm628, %v620
        %638 = vst.msk [vmem:[#allocation2 + $0x48] sm:$0xff] %vm628, %v621
        %639 = vst.msk [vmem:[#allocation2 + $0x50] sm:$0xff] %vm628, %v622
        %640 = vst.msk [vmem:[#allocation2 + $0x58] sm:$0xff] %vm628, %v623
        %641 = vst.msk [vmem:[#allocation2 + $0x60] sm:$0xff] %vm628, %v624
        %642 = vst.msk [vmem:[#allocation2 + $0x68] sm:$0xff] %vm628, %v625
        %643 = vst.msk [vmem:[#allocation2 + $0x70] sm:$0xff] %vm628, %v626
        %644 = vst.msk [vmem:[#allocation2 + $0x78] sm:$0xff] %vm628, %v627
        %p645 = scmp.eq.s32.totalorder %s28, 5
        %p646 = scmp.ne.s32.totalorder %s399, %s391
        %p647 = por %p645, %p646
        // Predicated region
        $region83: #{ngcf_layer.1} parent=73 // pred_check
          %p648 = pneg %p647
        $region84: #{ngcf_layer.1} parent=73 // pred_check_branch
          %650 = sbr.rel (%p648) target = $region86
        $region85: #{ngcf_layer.1} parent=73 // pred_region
          %v651 = vld [vmem:[#allocation2] sm:$0xff]
          %v652 = vld [vmem:[#allocation2 + $0x8] sm:$0xff]
          %v653 = vld [vmem:[#allocation2 + $0x10] sm:$0xff]
          %v654 = vld [vmem:[#allocation2 + $0x18] sm:$0xff]
          %v655 = vld [vmem:[#allocation2 + $0x20] sm:$0xff]
          %v656 = vld [vmem:[#allocation2 + $0x28] sm:$0xff]
          %v657 = vld [vmem:[#allocation2 + $0x30] sm:$0xff]
          %v658 = vld [vmem:[#allocation2 + $0x38] sm:$0xff]
          %v659 = vld [vmem:[#allocation2 + $0x40] sm:$0xff]
          %v660 = vld [vmem:[#allocation2 + $0x48] sm:$0xff]
          %v661 = vld [vmem:[#allocation2 + $0x50] sm:$0xff]
          %v662 = vld [vmem:[#allocation2 + $0x58] sm:$0xff]
          %v663 = vld [vmem:[#allocation2 + $0x60] sm:$0xff]
          %v664 = vld [vmem:[#allocation2 + $0x68] sm:$0xff]
          %v665 = vld [vmem:[#allocation2 + $0x70] sm:$0xff]
          %v666 = vld [vmem:[#allocation2 + $0x78] sm:$0xff]
          %v667 = vld [vmem:[%s379] sm:$0xff]
          %v668 = vld [vmem:[%s379 + $0x8] sm:$0xff]
          %v669 = vld [vmem:[%s379 + $0x10] sm:$0xff]
          %v670 = vld [vmem:[%s379 + $0x18] sm:$0xff]
          %v671 = vld [vmem:[%s379 + $0x20] sm:$0xff]
          %v672 = vld [vmem:[%s379 + $0x28] sm:$0xff]
          %v673 = vld [vmem:[%s379 + $0x30] sm:$0xff]
          %v674 = vld [vmem:[%s379 + $0x38] sm:$0xff]
          %v675 = vld [vmem:[%s379 + $0x40] sm:$0xff]
          %v676 = vld [vmem:[%s379 + $0x48] sm:$0xff]
          %v677 = vld [vmem:[%s379 + $0x50] sm:$0xff]
          %v678 = vld [vmem:[%s379 + $0x58] sm:$0xff]
          %v679 = vld [vmem:[%s379 + $0x60] sm:$0xff]
          %v680 = vld [vmem:[%s379 + $0x68] sm:$0xff]
          %v681 = vld [vmem:[%s379 + $0x70] sm:$0xff]
          %v682 = vld [vmem:[%s379 + $0x78] sm:$0xff]
          %684 = vset.pattern.permute.xlu0 0
          %685 = vperm.xlu0 %684, %v667
          %v686 = vpop.permute.xlu0 %685
          %689 = vset.pattern.permute.xlu0 0
          %690 = vperm.xlu0 %689, %v668
          %v691 = vpop.permute.xlu0 %690
          %694 = vset.pattern.permute.xlu0 0
          %695 = vperm.xlu0 %694, %v669
          %v696 = vpop.permute.xlu0 %695
          %699 = vset.pattern.permute.xlu0 0
          %700 = vperm.xlu0 %699, %v670
          %v701 = vpop.permute.xlu0 %700
          %704 = vset.pattern.permute.xlu0 0
          %705 = vperm.xlu0 %704, %v671
          %v706 = vpop.permute.xlu0 %705
          %709 = vset.pattern.permute.xlu0 0
          %710 = vperm.xlu0 %709, %v672
          %v711 = vpop.permute.xlu0 %710
          %714 = vset.pattern.permute.xlu0 0
          %715 = vperm.xlu0 %714, %v673
          %v716 = vpop.permute.xlu0 %715
          %719 = vset.pattern.permute.xlu0 0
          %720 = vperm.xlu0 %719, %v674
          %v721 = vpop.permute.xlu0 %720
          %724 = vset.pattern.permute.xlu0 0
          %725 = vperm.xlu0 %724, %v675
          %v726 = vpop.permute.xlu0 %725
          %729 = vset.pattern.permute.xlu0 0
          %730 = vperm.xlu0 %729, %v676
          %v731 = vpop.permute.xlu0 %730
          %734 = vset.pattern.permute.xlu0 0
          %735 = vperm.xlu0 %734, %v677
          %v736 = vpop.permute.xlu0 %735
          %739 = vset.pattern.permute.xlu0 0
          %740 = vperm.xlu0 %739, %v678
          %v741 = vpop.permute.xlu0 %740
          %744 = vset.pattern.permute.xlu0 0
          %745 = vperm.xlu0 %744, %v679
          %v746 = vpop.permute.xlu0 %745
          %749 = vset.pattern.permute.xlu0 0
          %750 = vperm.xlu0 %749, %v680
          %v751 = vpop.permute.xlu0 %750
          %754 = vset.pattern.permute.xlu0 0
          %755 = vperm.xlu0 %754, %v681
          %v756 = vpop.permute.xlu0 %755
          %759 = vset.pattern.permute.xlu0 0
          %760 = vperm.xlu0 %759, %v682
          %v761 = vpop.permute.xlu0 %760
          %v763 = vmul.f32 %v651, %v686
          %v764 = vmul.f32 %v652, %v691
          %v765 = vmul.f32 %v653, %v696
          %v766 = vmul.f32 %v654, %v701
          %v767 = vmul.f32 %v655, %v706
          %v768 = vmul.f32 %v656, %v711
          %v769 = vmul.f32 %v657, %v716
          %v770 = vmul.f32 %v658, %v721
          %v771 = vmul.f32 %v659, %v726
          %v772 = vmul.f32 %v660, %v731
          %v773 = vmul.f32 %v661, %v736
          %v774 = vmul.f32 %v662, %v741
          %v775 = vmul.f32 %v663, %v746
          %v776 = vmul.f32 %v664, %v751
          %v777 = vmul.f32 %v665, %v756
          %v778 = vmul.f32 %v666, %v761
          %v779 = vld [vmem:[%s371] sm:$0xff]
          %v780 = vld [vmem:[%s371 + $0x8] sm:$0xff]
          %v781 = vld [vmem:[%s371 + $0x10] sm:$0xff]
          %v782 = vld [vmem:[%s371 + $0x18] sm:$0xff]
          %v783 = vld [vmem:[%s371 + $0x20] sm:$0xff]
          %v784 = vld [vmem:[%s371 + $0x28] sm:$0xff]
          %v785 = vld [vmem:[%s371 + $0x30] sm:$0xff]
          %v786 = vld [vmem:[%s371 + $0x38] sm:$0xff]
          %v787 = vld [vmem:[%s371 + $0x40] sm:$0xff]
          %v788 = vld [vmem:[%s371 + $0x48] sm:$0xff]
          %v789 = vld [vmem:[%s371 + $0x50] sm:$0xff]
          %v790 = vld [vmem:[%s371 + $0x58] sm:$0xff]
          %v791 = vld [vmem:[%s371 + $0x60] sm:$0xff]
          %v792 = vld [vmem:[%s371 + $0x68] sm:$0xff]
          %v793 = vld [vmem:[%s371 + $0x70] sm:$0xff]
          %v794 = vld [vmem:[%s371 + $0x78] sm:$0xff]
          %v795 = vld [vmem:[%s6] sm:$0xf]
          %v796 = vld [vmem:[%s6 + $0x4] sm:$0xf]
          %v797 = vld [vmem:[%s6 + $0x8] sm:$0xf]
          %v798 = vld [vmem:[%s6 + $0xc] sm:$0xf]
          %v799 = vld [vmem:[%s6 + $0x10] sm:$0xf]
          %v800 = vld [vmem:[%s6 + $0x14] sm:$0xf]
          %v801 = vld [vmem:[%s6 + $0x18] sm:$0xf]
          %v802 = vld [vmem:[%s6 + $0x1c] sm:$0xf]
          %v803 = vadd.f32 %v763, %v779
          %v804 = vadd.f32 %v764, %v780
          %v805 = vadd.f32 %v765, %v781
          %v806 = vadd.f32 %v766, %v782
          %v807 = vadd.f32 %v767, %v783
          %v808 = vadd.f32 %v768, %v784
          %v809 = vadd.f32 %v769, %v785
          %v810 = vadd.f32 %v770, %v786
          %v811 = vadd.f32 %v771, %v787
          %v812 = vadd.f32 %v772, %v788
          %v813 = vadd.f32 %v773, %v789
          %v814 = vadd.f32 %v774, %v790
          %v815 = vadd.f32 %v775, %v791
          %v816 = vadd.f32 %v776, %v792
          %v817 = vadd.f32 %v777, %v793
          %v818 = vadd.f32 %v778, %v794
          %v819 = vpack.c.bf16 %v804, %v803
          %v820 = vpack.c.bf16 %v806, %v805
          %v821 = vpack.c.bf16 %v808, %v807
          %v822 = vpack.c.bf16 %v810, %v809
          %v823 = vpack.c.bf16 %v812, %v811
          %v824 = vpack.c.bf16 %v814, %v813
          %v825 = vpack.c.bf16 %v816, %v815
          %v826 = vpack.c.bf16 %v818, %v817
          %v827 = vmul.f32 %v779, %v763
          %v828 = vmul.f32 %v780, %v764
          %v829 = vmul.f32 %v781, %v765
          %v830 = vmul.f32 %v782, %v766
          %v831 = vmul.f32 %v783, %v767
          %v832 = vmul.f32 %v784, %v768
          %v833 = vmul.f32 %v785, %v769
          %v834 = vmul.f32 %v786, %v770
          %v835 = vmul.f32 %v787, %v771
          %v836 = vmul.f32 %v788, %v772
          %v837 = vmul.f32 %v789, %v773
          %v838 = vmul.f32 %v790, %v774
          %v839 = vmul.f32 %v791, %v775
          %v840 = vmul.f32 %v792, %v776
          %v841 = vmul.f32 %v793, %v777
          %v842 = vmul.f32 %v794, %v778
          %v843 = vpack.c.bf16 %v828, %v827
          %v844 = vpack.c.bf16 %v830, %v829
          %v845 = vpack.c.bf16 %v832, %v831
          %v846 = vpack.c.bf16 %v834, %v833
          %v847 = vpack.c.bf16 %v836, %v835
          %v848 = vpack.c.bf16 %v838, %v837
          %v849 = vpack.c.bf16 %v840, %v839
          %v850 = vpack.c.bf16 %v842, %v841
          %v855 = vunpack.c.l.b16 %v799
          %v856 = vunpack.c.l.b16 %v800
          %v857 = vunpack.c.l.b16 %v801
          %v858 = vunpack.c.l.b16 %v802
          %v859 = vpack.c.b16 %v856, %v855
          %v860 = vpack.c.b16 %v858, %v857
          %v864 = vsel %vm628, %v843, 0
          %v867 = vsel %vm628, %v844, 0
          %v870 = vsel %vm628, %v845, 0
          %v873 = vsel %vm628, %v846, 0
          %v876 = vsel %vm628, %v847, 0
          %v879 = vsel %vm628, %v848, 0
          %v882 = vsel %vm628, %v849, 0
          %v885 = vsel %vm628, %v850, 0
          %887 = vmatprep.subr.bf16.mxu0 0
          %888 = vmatpush1.bf16.msra.mxu0 %v859
          %889 = vmatprep.subr.bf16.mxu0 0
          %890 = vmatpush1.bf16.msra.mxu0 %v860
          %891 = vmatprep.subr.bf16.mxu0 0
          %892 = vmatpush1.bf16.msra.mxu0 0
          %893 = vmatprep.subr.bf16.mxu0 0
          %894 = vmatpush1.bf16.msra.mxu0 0
          %895 = vmatprep.subr.bf16.mxu0 0
          %896 = vmatpush1.bf16.msra.mxu0 0
          %897 = vmatprep.subr.bf16.mxu0 0
          %898 = vmatpush1.bf16.msra.mxu0 0
          %899 = vmatprep.subr.bf16.mxu0 0
          %900 = vmatpush1.bf16.msra.mxu0 0
          %901 = vmatprep.subr.bf16.mxu0 0
          %902 = vmatpush1.bf16.msra.mxu0 0
          %903 = vmatprep.subr.bf16.mxu0 0
          %904 = vmatpush1.bf16.msra.mxu0 0
          %905 = vmatprep.subr.bf16.mxu0 0
          %906 = vmatpush1.bf16.msra.mxu0 0
          %907 = vmatprep.subr.bf16.mxu0 0
          %908 = vmatpush1.bf16.msra.mxu0 0
          %909 = vmatprep.subr.bf16.mxu0 0
          %910 = vmatpush1.bf16.msra.mxu0 0
          %911 = vmatprep.subr.bf16.mxu0 0
          %912 = vmatpush1.bf16.msra.mxu0 0
          %913 = vmatprep.subr.bf16.mxu0 0
          %914 = vmatpush1.bf16.msra.mxu0 0
          %915 = vmatprep.subr.bf16.mxu0 0
          %916 = vmatpush1.bf16.msra.mxu0 0
          %917 = vmatprep.subr.bf16.mxu0 0
          %918 = vmatpush1.bf16.msra.mxu0 0
          %919 = vmatprep.mubr.bf16.mxu0 0
          %920 = vmatmul.mubr.bf16.gmra.mrb[0].mxu0 %v864
          %v921 = vpop.f32.mrb[0].mxu0
          %v922 = vadd.f32 0.0, %v921
          %v923 = vpop.f32.mrb[0].mxu0
          %v924 = vpop.f32.mrb[0].mxu0
          %v925 = vadd.f32 0.0, %v924
          %v926 = vpop.f32.mrb[0].mxu0
          %927 = vmatprep.mubr.bf16.mxu0 0
          %928 = vmatmul.mubr.bf16.gmra.mrb[0].mxu0 %v867
          %v929 = vpop.f32.mrb[0].mxu0
          %v930 = vadd.f32 0.0, %v929
          %v931 = vpop.f32.mrb[0].mxu0
          %v932 = vpop.f32.mrb[0].mxu0
          %v933 = vadd.f32 0.0, %v932
          %v934 = vpop.f32.mrb[0].mxu0
          %935 = vmatprep.mubr.bf16.mxu0 0
          %936 = vmatmul.mubr.bf16.gmra.mrb[0].mxu0 %v870
          %v937 = vpop.f32.mrb[0].mxu0
          %v938 = vadd.f32 0.0, %v937
          %v939 = vpop.f32.mrb[0].mxu0
          %v940 = vpop.f32.mrb[0].mxu0
          %v941 = vadd.f32 0.0, %v940
          %v942 = vpop.f32.mrb[0].mxu0
          %943 = vmatprep.mubr.bf16.mxu0 0
          %944 = vmatmul.mubr.bf16.gmra.mrb[0].mxu0 %v873
          %v945 = vpop.f32.mrb[0].mxu0
          %v946 = vadd.f32 0.0, %v945
          %v947 = vpop.f32.mrb[0].mxu0
          %v948 = vpop.f32.mrb[0].mxu0
          %v949 = vadd.f32 0.0, %v948
          %v950 = vpop.f32.mrb[0].mxu0
          %951 = vmatprep.mubr.bf16.mxu0 0
          %952 = vmatmul.mubr.bf16.gmra.mrb[0].mxu0 %v876
          %v953 = vpop.f32.mrb[0].mxu0
          %v954 = vadd.f32 0.0, %v953
          %v955 = vpop.f32.mrb[0].mxu0
          %v956 = vpop.f32.mrb[0].mxu0
          %v957 = vadd.f32 0.0, %v956
          %v958 = vpop.f32.mrb[0].mxu0
          %959 = vmatprep.mubr.bf16.mxu0 0
          %960 = vmatmul.mubr.bf16.gmra.mrb[0].mxu0 %v879
          %v961 = vpop.f32.mrb[0].mxu0
          %v962 = vadd.f32 0.0, %v961
          %v963 = vpop.f32.mrb[0].mxu0
          %v964 = vpop.f32.mrb[0].mxu0
          %v965 = vadd.f32 0.0, %v964
          %v966 = vpop.f32.mrb[0].mxu0
          %967 = vmatprep.mubr.bf16.mxu0 0
          %968 = vmatmul.mubr.bf16.gmra.mrb[0].mxu0 %v882
          %v969 = vpop.f32.mrb[0].mxu0
          %v970 = vadd.f32 0.0, %v969
          %v971 = vpop.f32.mrb[0].mxu0
          %v972 = vpop.f32.mrb[0].mxu0
          %v973 = vadd.f32 0.0, %v972
          %v974 = vpop.f32.mrb[0].mxu0
          %975 = vmatprep.mubr.bf16.mxu0 0
          %976 = vmatmul.mubr.bf16.gmra.mrb[0].mxu0 %v885
          %v977 = vpop.f32.mrb[0].mxu0
          %v978 = vadd.f32 0.0, %v977
          %v979 = vpop.f32.mrb[0].mxu0
          %v980 = vpop.f32.mrb[0].mxu0
          %v981 = vadd.f32 0.0, %v980
          %v982 = vpop.f32.mrb[0].mxu0
          %983 = vdwg.mxu0
          %v988 = vunpack.c.l.b16 %v795
          %v989 = vunpack.c.l.b16 %v796
          %v990 = vunpack.c.l.b16 %v797
          %v991 = vunpack.c.l.b16 %v798
          %v992 = vpack.c.b16 %v989, %v988
          %v993 = vpack.c.b16 %v991, %v990
          %v997 = vsel %vm628, %v819, 0
          %v1000 = vsel %vm628, %v820, 0
          %v1003 = vsel %vm628, %v821, 0
          %v1006 = vsel %vm628, %v822, 0
          %v1009 = vsel %vm628, %v823, 0
          %v1012 = vsel %vm628, %v824, 0
          %v1015 = vsel %vm628, %v825, 0
          %v1018 = vsel %vm628, %v826, 0
          %1020 = vmatprep.subr.bf16.mxu0 0
          %1021 = vmatpush1.bf16.msra.mxu0 %v992
          %1022 = vmatprep.subr.bf16.mxu0 0
          %1023 = vmatpush1.bf16.msra.mxu0 %v993
          %1024 = vmatprep.subr.bf16.mxu0 0
          %1025 = vmatpush1.bf16.msra.mxu0 0
          %1026 = vmatprep.subr.bf16.mxu0 0
          %1027 = vmatpush1.bf16.msra.mxu0 0
          %1028 = vmatprep.subr.bf16.mxu0 0
          %1029 = vmatpush1.bf16.msra.mxu0 0
          %1030 = vmatprep.subr.bf16.mxu0 0
          %1031 = vmatpush1.bf16.msra.mxu0 0
          %1032 = vmatprep.subr.bf16.mxu0 0
          %1033 = vmatpush1.bf16.msra.mxu0 0
          %1034 = vmatprep.subr.bf16.mxu0 0
          %1035 = vmatpush1.bf16.msra.mxu0 0
          %1036 = vmatprep.subr.bf16.mxu0 0
          %1037 = vmatpush1.bf16.msra.mxu0 0
          %1038 = vmatprep.subr.bf16.mxu0 0
          %1039 = vmatpush1.bf16.msra.mxu0 0
          %1040 = vmatprep.subr.bf16.mxu0 0
          %1041 = vmatpush1.bf16.msra.mxu0 0
          %1042 = vmatprep.subr.bf16.mxu0 0
          %1043 = vmatpush1.bf16.msra.mxu0 0
          %1044 = vmatprep.subr.bf16.mxu0 0
          %1045 = vmatpush1.bf16.msra.mxu0 0
          %1046 = vmatprep.subr.bf16.mxu0 0
          %1047 = vmatpush1.bf16.msra.mxu0 0
          %1048 = vmatprep.subr.bf16.mxu0 0
          %1049 = vmatpush1.bf16.msra.mxu0 0
          %1050 = vmatprep.subr.bf16.mxu0 0
          %1051 = vmatpush1.bf16.msra.mxu0 0
          %1052 = vmatprep.mubr.bf16.mxu0 0
          %1053 = vmatmul.mubr.bf16.gmra.mrb[0].mxu0 %v997
          %v1054 = vpop.f32.mrb[0].mxu0
          %v1055 = vadd.f32 %v922, %v1054
          %v1056 = vpop.f32.mrb[0].mxu0
          %v1057 = vpop.f32.mrb[0].mxu0
          %v1058 = vadd.f32 %v925, %v1057
          %v1059 = vpop.f32.mrb[0].mxu0
          %1060 = vmatprep.mubr.bf16.mxu0 0
          %1061 = vmatmul.mubr.bf16.gmra.mrb[0].mxu0 %v1000
          %v1062 = vpop.f32.mrb[0].mxu0
          %v1063 = vadd.f32 %v930, %v1062
          %v1064 = vpop.f32.mrb[0].mxu0
          %v1065 = vpop.f32.mrb[0].mxu0
          %v1066 = vadd.f32 %v933, %v1065
          %v1067 = vpop.f32.mrb[0].mxu0
          %1068 = vmatprep.mubr.bf16.mxu0 0
          %1069 = vmatmul.mubr.bf16.gmra.mrb[0].mxu0 %v1003
          %v1070 = vpop.f32.mrb[0].mxu0
          %v1071 = vadd.f32 %v938, %v1070
          %v1072 = vpop.f32.mrb[0].mxu0
          %v1073 = vpop.f32.mrb[0].mxu0
          %v1074 = vadd.f32 %v941, %v1073
          %v1075 = vpop.f32.mrb[0].mxu0
          %1076 = vmatprep.mubr.bf16.mxu0 0
          %1077 = vmatmul.mubr.bf16.gmra.mrb[0].mxu0 %v1006
          %v1078 = vpop.f32.mrb[0].mxu0
          %v1079 = vadd.f32 %v946, %v1078
          %v1080 = vpop.f32.mrb[0].mxu0
          %v1081 = vpop.f32.mrb[0].mxu0
          %v1082 = vadd.f32 %v949, %v1081
          %v1083 = vpop.f32.mrb[0].mxu0
          %1084 = vmatprep.mubr.bf16.mxu0 0
          %1085 = vmatmul.mubr.bf16.gmra.mrb[0].mxu0 %v1009
          %v1086 = vpop.f32.mrb[0].mxu0
          %v1087 = vadd.f32 %v954, %v1086
          %v1088 = vpop.f32.mrb[0].mxu0
          %v1089 = vpop.f32.mrb[0].mxu0
          %v1090 = vadd.f32 %v957, %v1089
          %v1091 = vpop.f32.mrb[0].mxu0
          %1092 = vmatprep.mubr.bf16.mxu0 0
          %1093 = vmatmul.mubr.bf16.gmra.mrb[0].mxu0 %v1012
          %v1094 = vpop.f32.mrb[0].mxu0
          %v1095 = vadd.f32 %v962, %v1094
          %v1096 = vpop.f32.mrb[0].mxu0
          %v1097 = vpop.f32.mrb[0].mxu0
          %v1098 = vadd.f32 %v965, %v1097
          %v1099 = vpop.f32.mrb[0].mxu0
          %1100 = vmatprep.mubr.bf16.mxu0 0
          %1101 = vmatmul.mubr.bf16.gmra.mrb[0].mxu0 %v1015
          %v1102 = vpop.f32.mrb[0].mxu0
          %v1103 = vadd.f32 %v970, %v1102
          %v1104 = vpop.f32.mrb[0].mxu0
          %v1105 = vpop.f32.mrb[0].mxu0
          %v1106 = vadd.f32 %v973, %v1105
          %v1107 = vpop.f32.mrb[0].mxu0
          %1108 = vmatprep.mubr.bf16.mxu0 0
          %1109 = vmatmul.mubr.bf16.gmra.mrb[0].mxu0 %v1018
          %v1110 = vpop.f32.mrb[0].mxu0
          %v1111 = vadd.f32 %v978, %v1110
          %v1112 = vpop.f32.mrb[0].mxu0
          %v1113 = vpop.f32.mrb[0].mxu0
          %v1114 = vadd.f32 %v981, %v1113
          %v1115 = vpop.f32.mrb[0].mxu0
          %1116 = vdwg.mxu0
          %vm1117 = vcmp.ge.f32.partialorder %v1055, 0.0
          %vm1118 = vcmp.ge.f32.partialorder %v1058, 0.0
          %vm1119 = vcmp.ge.f32.partialorder %v1063, 0.0
          %vm1120 = vcmp.ge.f32.partialorder %v1066, 0.0
          %vm1121 = vcmp.ge.f32.partialorder %v1071, 0.0
          %vm1122 = vcmp.ge.f32.partialorder %v1074, 0.0
          %vm1123 = vcmp.ge.f32.partialorder %v1079, 0.0
          %vm1124 = vcmp.ge.f32.partialorder %v1082, 0.0
          %vm1125 = vcmp.ge.f32.partialorder %v1087, 0.0
          %vm1126 = vcmp.ge.f32.partialorder %v1090, 0.0
          %vm1127 = vcmp.ge.f32.partialorder %v1095, 0.0
          %vm1128 = vcmp.ge.f32.partialorder %v1098, 0.0
          %vm1129 = vcmp.ge.f32.partialorder %v1103, 0.0
          %vm1130 = vcmp.ge.f32.partialorder %v1106, 0.0
          %vm1131 = vcmp.ge.f32.partialorder %v1111, 0.0
          %vm1132 = vcmp.ge.f32.partialorder %v1114, 0.0
          %v1133 = vmul.f32 %v1055, 0.2
          %v1134 = vmul.f32 %v1058, 0.2
          %v1135 = vmul.f32 %v1063, 0.2
          %v1136 = vmul.f32 %v1066, 0.2
          %v1137 = vmul.f32 %v1071, 0.2
          %v1138 = vmul.f32 %v1074, 0.2
          %v1139 = vmul.f32 %v1079, 0.2
          %v1140 = vmul.f32 %v1082, 0.2
          %v1141 = vmul.f32 %v1087, 0.2
          %v1142 = vmul.f32 %v1090, 0.2
          %v1143 = vmul.f32 %v1095, 0.2
          %v1144 = vmul.f32 %v1098, 0.2
          %v1145 = vmul.f32 %v1103, 0.2
          %v1146 = vmul.f32 %v1106, 0.2
          %v1147 = vmul.f32 %v1111, 0.2
          %v1148 = vmul.f32 %v1114, 0.2
          %v1149 = vsel %vm1117, %v1055, %v1133
          %v1150 = vsel %vm1118, %v1058, %v1134
          %v1151 = vsel %vm1119, %v1063, %v1135
          %v1152 = vsel %vm1120, %v1066, %v1136
          %v1153 = vsel %vm1121, %v1071, %v1137
          %v1154 = vsel %vm1122, %v1074, %v1138
          %v1155 = vsel %vm1123, %v1079, %v1139
          %v1156 = vsel %vm1124, %v1082, %v1140
          %v1157 = vsel %vm1125, %v1087, %v1141
          %v1158 = vsel %vm1126, %v1090, %v1142
          %v1159 = vsel %vm1127, %v1095, %v1143
          %v1160 = vsel %vm1128, %v1098, %v1144
          %v1161 = vsel %vm1129, %v1103, %v1145
          %v1162 = vsel %vm1130, %v1106, %v1146
          %v1163 = vsel %vm1131, %v1111, %v1147
          %v1164 = vsel %vm1132, %v1114, %v1148
          %v1165 = vmul.f32 %v1149, %v1149
          %v1166 = vmul.f32 %v1150, %v1150
          %v1167 = vmul.f32 %v1151, %v1151
          %v1168 = vmul.f32 %v1152, %v1152
          %v1169 = vmul.f32 %v1153, %v1153
          %v1170 = vmul.f32 %v1154, %v1154
          %v1171 = vmul.f32 %v1155, %v1155
          %v1172 = vmul.f32 %v1156, %v1156
          %v1173 = vmul.f32 %v1157, %v1157
          %v1174 = vmul.f32 %v1158, %v1158
          %v1175 = vmul.f32 %v1159, %v1159
          %v1176 = vmul.f32 %v1160, %v1160
          %v1177 = vmul.f32 %v1161, %v1161
          %v1178 = vmul.f32 %v1162, %v1162
          %v1179 = vmul.f32 %v1163, %v1163
          %v1180 = vmul.f32 %v1164, %v1164
          %v1181 = vsel %vm628, %v1165, 0.0
          %1182 = vadd.xlane.f32.xlu0 %v1181
          %v1183 = vpop.xlane.xlu0 %1182
          %v1184 = vsel %vm628, %v1166, 0.0
          %1185 = vadd.xlane.f32.xlu0 %v1184
          %v1186 = vpop.xlane.xlu0 %1185
          %v1187 = vsel %vm628, %v1167, 0.0
          %1188 = vadd.xlane.f32.xlu0 %v1187
          %v1189 = vpop.xlane.xlu0 %1188
          %v1190 = vsel %vm628, %v1168, 0.0
          %1191 = vadd.xlane.f32.xlu0 %v1190
          %v1192 = vpop.xlane.xlu0 %1191
          %v1193 = vsel %vm628, %v1169, 0.0
          %1194 = vadd.xlane.f32.xlu0 %v1193
          %v1195 = vpop.xlane.xlu0 %1194
          %v1196 = vsel %vm628, %v1170, 0.0
          %1197 = vadd.xlane.f32.xlu0 %v1196
          %v1198 = vpop.xlane.xlu0 %1197
          %v1199 = vsel %vm628, %v1171, 0.0
          %1200 = vadd.xlane.f32.xlu0 %v1199
          %v1201 = vpop.xlane.xlu0 %1200
          %v1202 = vsel %vm628, %v1172, 0.0
          %1203 = vadd.xlane.f32.xlu0 %v1202
          %v1204 = vpop.xlane.xlu0 %1203
          %v1205 = vsel %vm628, %v1173, 0.0
          %1206 = vadd.xlane.f32.xlu0 %v1205
          %v1207 = vpop.xlane.xlu0 %1206
          %v1208 = vsel %vm628, %v1174, 0.0
          %1209 = vadd.xlane.f32.xlu0 %v1208
          %v1210 = vpop.xlane.xlu0 %1209
          %v1211 = vsel %vm628, %v1175, 0.0
          %1212 = vadd.xlane.f32.xlu0 %v1211
          %v1213 = vpop.xlane.xlu0 %1212
          %v1214 = vsel %vm628, %v1176, 0.0
          %1215 = vadd.xlane.f32.xlu0 %v1214
          %v1216 = vpop.xlane.xlu0 %1215
          %v1217 = vsel %vm628, %v1177, 0.0
          %1218 = vadd.xlane.f32.xlu0 %v1217
          %v1219 = vpop.xlane.xlu0 %1218
          %v1220 = vsel %vm628, %v1178, 0.0
          %1221 = vadd.xlane.f32.xlu0 %v1220
          %v1222 = vpop.xlane.xlu0 %1221
          %v1223 = vsel %vm628, %v1179, 0.0
          %1224 = vadd.xlane.f32.xlu0 %v1223
          %v1225 = vpop.xlane.xlu0 %1224
          %v1226 = vsel %vm628, %v1180, 0.0
          %1227 = vadd.xlane.f32.xlu0 %v1226
          %v1228 = vpop.xlane.xlu0 %1227
          %v1229 = vmax.f32 %v1183, 1e-24
          %v1230 = vmax.f32 %v1186, 1e-24
          %v1231 = vmax.f32 %v1189, 1e-24
          %v1232 = vmax.f32 %v1192, 1e-24
          %v1233 = vmax.f32 %v1195, 1e-24
          %v1234 = vmax.f32 %v1198, 1e-24
          %v1235 = vmax.f32 %v1201, 1e-24
          %v1236 = vmax.f32 %v1204, 1e-24
          %v1237 = vmax.f32 %v1207, 1e-24
          %v1238 = vmax.f32 %v1210, 1e-24
          %v1239 = vmax.f32 %v1213, 1e-24
          %v1240 = vmax.f32 %v1216, 1e-24
          %v1241 = vmax.f32 %v1219, 1e-24
          %v1242 = vmax.f32 %v1222, 1e-24
          %v1243 = vmax.f32 %v1225, 1e-24
          %v1244 = vmax.f32 %v1228, 1e-24
          %v1245 = vrsqrt.pop %v1229
          %v1246 = vrsqrt.pop %v1230
          %v1247 = vrsqrt.pop %v1231
          %v1248 = vrsqrt.pop %v1232
          %v1249 = vrsqrt.pop %v1233
          %v1250 = vrsqrt.pop %v1234
          %v1251 = vrsqrt.pop %v1235
          %v1252 = vrsqrt.pop %v1236
          %v1253 = vrsqrt.pop %v1237
          %v1254 = vrsqrt.pop %v1238
          %v1255 = vrsqrt.pop %v1239
          %v1256 = vrsqrt.pop %v1240
          %v1257 = vrsqrt.pop %v1241
          %v1258 = vrsqrt.pop %v1242
          %v1259 = vrsqrt.pop %v1243
          %v1260 = vrsqrt.pop %v1244
          %v1261 = vmul.f32 %v1149, %v1245
          %v1262 = vmul.f32 %v1150, %v1246
          %v1263 = vmul.f32 %v1151, %v1247
          %v1264 = vmul.f32 %v1152, %v1248
          %v1265 = vmul.f32 %v1153, %v1249
          %v1266 = vmul.f32 %v1154, %v1250
          %v1267 = vmul.f32 %v1155, %v1251
          %v1268 = vmul.f32 %v1156, %v1252
          %v1269 = vmul.f32 %v1157, %v1253
          %v1270 = vmul.f32 %v1158, %v1254
          %v1271 = vmul.f32 %v1159, %v1255
          %v1272 = vmul.f32 %v1160, %v1256
          %v1273 = vmul.f32 %v1161, %v1257
          %v1274 = vmul.f32 %v1162, %v1258
          %v1275 = vmul.f32 %v1163, %v1259
          %v1276 = vmul.f32 %v1164, %v1260
          %1277 = vst.msk [vmem:[%s387] sm:$0xff] %vm628, %v1261
          %1278 = vst.msk [vmem:[%s387 + $0x8] sm:$0xff] %vm628, %v1262
          %1279 = vst.msk [vmem:[%s387 + $0x10] sm:$0xff] %vm628, %v1263
          %1280 = vst.msk [vmem:[%s387 + $0x18] sm:$0xff] %vm628, %v1264
          %1281 = vst.msk [vmem:[%s387 + $0x20] sm:$0xff] %vm628, %v1265
          %1282 = vst.msk [vmem:[%s387 + $0x28] sm:$0xff] %vm628, %v1266
          %1283 = vst.msk [vmem:[%s387 + $0x30] sm:$0xff] %vm628, %v1267
          %1284 = vst.msk [vmem:[%s387 + $0x38] sm:$0xff] %vm628, %v1268
          %1285 = vst.msk [vmem:[%s387 + $0x40] sm:$0xff] %vm628, %v1269
          %1286 = vst.msk [vmem:[%s387 + $0x48] sm:$0xff] %vm628, %v1270
          %1287 = vst.msk [vmem:[%s387 + $0x50] sm:$0xff] %vm628, %v1271
          %1288 = vst.msk [vmem:[%s387 + $0x58] sm:$0xff] %vm628, %v1272
          %1289 = vst.msk [vmem:[%s387 + $0x60] sm:$0xff] %vm628, %v1273
          %1290 = vst.msk [vmem:[%s387 + $0x68] sm:$0xff] %vm628, %v1274
          %1291 = vst.msk [vmem:[%s387 + $0x70] sm:$0xff] %vm628, %v1275
          %1292 = vst.msk [vmem:[%s387 + $0x78] sm:$0xff] %vm628, %v1276
        $region86: #{ngcf_layer.1} parent=73 // pred_fallthru
          _
        %s1293 = sld [smem:[#allocation4 + %s28]]
        %s1294 = smul.u32 16, %s1293
        %p1295 = scmp.lt.s32.totalorder %s1294, 63
        %s1296 = scalar_select %p1295, %s1294, 63
        %s1297 = smul.addr %s1296, 8
        %s1298 = scalar_lea.vmem %s7, %s1297
        // Predicated region
        $region87: #{ngcf_layer.1} parent=73 // pred_check
          %p1299 = pneg %p185
        $region88: #{ngcf_layer.1} parent=73 // pred_check_branch
          %1301 = sbr.rel (%p1299) target = $region90
        $region89: #{ngcf_layer.1} parent=73 // pred_region
          %s1302 = sld [smem:[#allocation4 + %s28]]
          %s1303 = smul.u32 16, %s1302
        $region90: #{ngcf_layer.1} parent=73 // pred_fallthru
          _
      $region74: #{ngcf_layer.1} parent=5 // pred_fallthru
        _
      %p1304 = scmp.le.s32.totalorder 2, %s23
      // Predicated region
      $region91: #{ngcf_layer.1} parent=5 // pred_check
        %p1305 = pneg %p1304
      $region92: #{ngcf_layer.1} parent=5 // pred_check_branch
        %1307 = sbr.rel (%p1305) target = $region94
      $region93: #{ngcf_layer.1} parent=5 // pred_region
        %s1308 = ssub.s32 %s23, 2
        // Predicated region
        $region95: #{ngcf_layer.1} parent=93 // pred_check
          %p1309 = pneg %p191
        $region96: #{ngcf_layer.1} parent=93 // pred_check_branch
          %1311 = sbr.rel (%p1309) target = $region98
        $region97: #{ngcf_layer.1} parent=93 // pred_region
          %s1312 = sld [smem:[#allocation4 + %s29]]
          %s1313 = smul.u32 16, %s1312
          %p1314 = scmp.lt.s32.totalorder %s1313, 63
          %s1315 = scalar_select %p1314, %s1313, 63
          %s1316 = smul.addr %s1315, 8
          %s1317 = scalar_lea.vmem %s7, %s1316
        $region98: #{ngcf_layer.1} parent=93 // pred_fallthru
          _
      $region94: #{ngcf_layer.1} parent=5 // pred_fallthru
        _
    $region6: #{ngcf_layer.1} parent=1 // loop_footer
      %s27 = sadd.s32 1, %s23
    $region7: #{ngcf_layer.1} parent=1 // loop_footer_branch
      %22 = sbr.rel target = $region3
    $region8: #{ngcf_layer.1} parent=1 // loop_exit
      _

</llo_original>
